<compile_context>
chip_gen: v7x
topology: tpu7x:2x2x1
jax: 0.10.0
libtpu: 0.0.40
codegen_flags: <defaults>
</compile_context>

<pallas_src>
import functools

import jax
import jax.numpy as jnp
from jax.experimental import pallas as pl
from jax.experimental.pallas import tpu as pltpu

LANE = 128
_LIPSWISH_SCALE = 0.909


# ----------------------------------------------------------------------------
# Kernel
# ----------------------------------------------------------------------------
def _mlp_kernel(num_linear, use_tanh, x_ref, *refs):
    """Fused MLP forward.

    refs = (w0, b0, w1, b1, ..., wL, bL, out_ref)
    num_linear = number of Linear layers = num_layers + 1 (hidden + final).
    The 0.909 LipSwish scale has been folded into w1..wL by the one-time
    parameter prep, so the hidden nonlinearity here is plain SiLU.
    """
    out_ref = refs[-1]
    params = refs[:-1]

    h = x_ref[...]
    for i in range(num_linear):
        w = params[2 * i][...]
        b = params[2 * i + 1][...]
        # Feed the MXU in storage dtype (bf16); accumulate in f32.
        acc = jnp.dot(h.astype(w.dtype), w, preferred_element_type=jnp.float32)
        acc = acc + b.astype(jnp.float32)
        if i < num_linear - 1:
            acc = acc * jax.nn.sigmoid(acc)      # SiLU in f32 (EUP sigmoid)
            h = acc.astype(w.dtype)              # back to bf16 for next matmul
        else:
            h = acc
    if use_tanh:
        h = jnp.tanh(h)
    out_ref[...] = h.astype(out_ref.dtype)


# ----------------------------------------------------------------------------
# Helpers
# ----------------------------------------------------------------------------
def _round_up(n, m):
    return ((n + m - 1) // m) * m


def _pad2d(a, rows, cols):
    a = jnp.asarray(a)
    return jnp.pad(a, ((0, rows - a.shape[0]), (0, cols - a.shape[1])))


def _vmem_capacity_bytes():
    """Per-core VMEM capacity (v5e/v6e: 128 MiB, v7x: 64 MiB)."""
    if hasattr(pltpu, "get_tpu_info"):
        try:
            cap = getattr(pltpu.get_tpu_info(), "vmem_capacity_bytes", None)
            if cap:
                return int(cap)
        except Exception:
            pass
    return 64 * 2**20      # conservative (v7x-sized) default if query unavailable


def _choose_block_batch(batch, in_dim, pdims, x_itemsize):
    """Prefer few, large grid steps (per-step overhead ~0.35us).

    Tiles are multiples of 16 rows (bf16 sublane packing).  Split into >=2
    steps only when that still leaves >=128-row tiles (so a v7x megacore gets
    one step per TensorCore); split further only if a tile's f32 working set
    would exceed ~8 MiB.
    """
    if batch <= 128:
        return batch
    cands = [c for c in range(16, batch + 1, 16) if batch % c == 0]
    if not cands:
        return batch

    max_w = max(pdims)

    def tile_bytes(c):
        io = 2 * c * (in_dim + pdims[-1]) * x_itemsize      # double-buffered x/out
        act = 2 * c * max_w * 4                              # live f32 activations
        return io + act

    budget = 8 * 2**20
    ok = [c for c in cands if tile_bytes(c) <= budget] or [min(cands)]
    best = max(ok)
    if batch // best < 2:
        halves = [c for c in ok if batch // c >= 2 and c >= 128]
        if halves:
            best = max(halves)
    return best


# ----------------------------------------------------------------------------
# One-time parameter preparation (do NOT redo per forward call)
# ----------------------------------------------------------------------------
def prepare_mlp_params(weights, biases, param_dtype=jnp.bfloat16):
    """Fold LipSwish 0.909 into the next layer's weight, zero-pad output
    feature dims to 128 lanes, cast weights to bf16 (biases stay f32)."""
    num_linear = len(weights)
    in_dim = int(weights[0].shape[0])
    out_dim = int(weights[-1].shape[1])
    dims = [in_dim] + [int(w.shape[1]) for w in weights]
    # Input feature dim stays unpadded; output feature dims padded to lanes.
    pdims = [dims[0]] + [_round_up(d, LANE) for d in dims[1:]]

    ws, bs = [], []
    for i in range(num_linear):
        w = jnp.asarray(weights[i], jnp.float32)
        b = jnp.asarray(biases[i], jnp.float32).reshape(1, -1)
        if i > 0:
            w = w * _LIPSWISH_SCALE              # exact algebraic fold
        ws.append(_pad2d(w, pdims[i], pdims[i + 1]).astype(param_dtype))
        bs.append(_pad2d(b, 1, pdims[i + 1]))    # biases kept f32
    return {"weights": tuple(ws), "biases": tuple(bs), "out_dim": out_dim}


# ----------------------------------------------------------------------------
# Public forward
# ----------------------------------------------------------------------------
def mlp_forward(x, params, use_tanh, *, block_batch=None):
    """x: (B, in_dim).  params: output of prepare_mlp_params."""
    weights, biases, out_dim = params["weights"], params["biases"], params["out_dim"]
    num_linear = len(weights)
    B, in_dim = x.shape
    assert in_dim == weights[0].shape[0]
    pdims = [in_dim] + [int(w.shape[1]) for w in weights]

    if block_batch is None:
        block_batch = _choose_block_batch(B, in_dim, pdims, x.dtype.itemsize)
    assert B % block_batch == 0
    grid = (B // block_batch,)

    weight_bytes = sum(int(a.size) * a.dtype.itemsize for a in weights)
    weight_bytes += sum(int(a.size) * a.dtype.itemsize for a in biases)

    # ---- VMEM budget (per core) --------------------------------------------
    tile_io = block_batch * (in_dim + pdims[-1]) * x.dtype.itemsize
    act_live = 2 * block_batch * max(pdims) * 4
    need = 2 * weight_bytes + 2 * tile_io + act_live + (2 << 20)
    cap = int(0.75 * _vmem_capacity_bytes())     # ~48 MiB on v7x, ~96 MiB on v5e/v6e
    vmem_limit = int(min(max(need, 32 * 2**20), cap))

    # ---- advisory cost estimate ---------------------------------------------
    flops = 2 * B * sum(pdims[i] * pdims[i + 1] for i in range(num_linear))
    transcendentals = B * sum(pdims[i + 1] for i in range(num_linear - 1))
    if use_tanh:
        transcendentals += B * pdims[-1]
    io_bytes = B * (in_dim + pdims[-1]) * x.dtype.itemsize
    cost = pl.CostEstimate(flops=flops, transcendentals=transcendentals,
                           bytes_accessed=weight_bytes + io_bytes)

    # ---- specs ---------------------------------------------------------------
    in_specs = [pl.BlockSpec((block_batch, in_dim), lambda i: (i, 0))]
    for w, b in zip(weights, biases):
        # Constant index maps: the pipeline DMAs these once and re-uses the
        # resident block on later grid steps.
        in_specs.append(pl.BlockSpec(w.shape, lambda i: (0, 0)))
        in_specs.append(pl.BlockSpec(b.shape, lambda i: (0, 0)))
    out_specs = pl.BlockSpec((block_batch, pdims[-1]), lambda i: (i, 0))

    args = [x]
    for w, b in zip(weights, biases):
        args.append(w)
        args.append(b)

    kernel = functools.partial(_mlp_kernel, num_linear, use_tanh)

    out_p = pl.pallas_call(
        kernel,
        out_shape=jax.ShapeDtypeStruct((B, pdims[-1]), x.dtype),
        grid_spec=pltpu.PrefetchScalarGridSpec(
            num_scalar_prefetch=0,
            grid=grid,
            in_specs=in_specs,
            out_specs=out_specs,
        ),
        compiler_params=pltpu.CompilerParams(
            dimension_semantics=("parallel",),
            vmem_limit_bytes=vmem_limit,
        ),
        cost_estimate=cost,
    )(*args)

    return out_p[:, :out_dim]


# ----------------------------------------------------------------------------
# Params init + pure-JAX reference (PyTorch semantics, f32)
# ----------------------------------------------------------------------------
def init_mlp_params(key, input_dim, out_dim, hidden_dim, num_layers):
    """Weights returned as (in, out) = transpose of nn.Linear weight."""
    dims = [input_dim] + [hidden_dim] * num_layers + [out_dim]
    weights, biases = [], []
    for i in range(len(dims) - 1):
        fan_in, fan_out = dims[i], dims[i + 1]
        key, wk, bk = jax.random.split(key, 3)
        bound = 1.0 / jnp.sqrt(fan_in)
        weights.append(jax.random.uniform(wk, (fan_in, fan_out), jnp.float32, -bound, bound))
        biases.append(jax.random.uniform(bk, (1, fan_out), jnp.float32, -bound, bound))
    return weights, biases


def mlp_reference(x, weights, biases, use_tanh):
    h = x.astype(jnp.float32)
    n = len(weights)
    for i in range(n):
        h = h @ weights[i] + biases[i]
        if i < n - 1:
            h = 0.909 * h * jax.nn.sigmoid(h)     # LipSwish
    if use_tanh:
        h = jnp.tanh(h)
    return h.astype(x.dtype)


if __name__ == "__main__":
    # MLP(input_dim=4, out_dim=4, hidden_dim=32, num_layers=3, tanh=True).
    # batch=256 -> block_batch=128, grid=2 (one step per v7x TensorCore).
    input_dim, out_dim, hidden_dim, num_layers, use_tanh = 4, 4, 32, 3, True
    batch = 256

    key = jax.random.PRNGKey(0)
    key, xk = jax.random.split(key)
    x = jax.random.normal(xk, (batch, input_dim), jnp.float32)

    weights, biases = init_mlp_params(key, input_dim, out_dim, hidden_dim, num_layers)

    # One-time prep (pad + LipSwish fold + bf16 cast) hoisted out of the forward.
    params = prepare_mlp_params(weights, biases, param_dtype=jnp.bfloat16)

    out = mlp_forward(x, params, use_tanh)
    out = jax.block_until_ready(out)

    ref = mlp_reference(x, weights, biases, use_tanh)
    assert out.shape == (batch, out_dim)
    # Tolerance loosened for bf16 weights / hidden activations (f32 accumulation).
    assert jnp.allclose(out, ref, atol=5e-2, rtol=5e-2), "mismatch vs reference"

    print("KERNEL_OK")
</pallas_src>

<mosaic_0001>
module attributes {stable_mosaic.version = 11 : i64} {
  func.func @_mlp_kernel(%arg0: i32, %arg1: memref<128x4xf32, #tpu.memory_space<vmem>>, %arg2: memref<4x128xbf16, #tpu.memory_space<vmem>>, %arg3: memref<1x128xf32, #tpu.memory_space<vmem>>, %arg4: memref<128x128xbf16, #tpu.memory_space<vmem>>, %arg5: memref<1x128xf32, #tpu.memory_space<vmem>>, %arg6: memref<128x128xbf16, #tpu.memory_space<vmem>>, %arg7: memref<1x128xf32, #tpu.memory_space<vmem>>, %arg8: memref<128x128xbf16, #tpu.memory_space<vmem>>, %arg9: memref<1x128xf32, #tpu.memory_space<vmem>>, %arg10: memref<128x128xf32, #tpu.memory_space<vmem>>) attributes {dimension_semantics = [#tpu.dimension_semantics<parallel>], iteration_bounds = array<i64: 2>, scalar_prefetch = 0 : i64, scratch_operands = 0 : i64, tpu.core_type = #tpu.core_type<tc>, window_params = [{transform_indices = @transform_0, window_bounds = array<i64: 128, 4>}, {pipeline_mode = #tpu.pipeline_mode<synchronous>, transform_indices = @transform_1, window_bounds = array<i64: 4, 128>}, {pipeline_mode = #tpu.pipeline_mode<synchronous>, transform_indices = @transform_2, window_bounds = array<i64: 1, 128>}, {pipeline_mode = #tpu.pipeline_mode<synchronous>, transform_indices = @transform_3, window_bounds = array<i64: 128, 128>}, {pipeline_mode = #tpu.pipeline_mode<synchronous>, transform_indices = @transform_4, window_bounds = array<i64: 1, 128>}, {pipeline_mode = #tpu.pipeline_mode<synchronous>, transform_indices = @transform_5, window_bounds = array<i64: 128, 128>}, {pipeline_mode = #tpu.pipeline_mode<synchronous>, transform_indices = @transform_6, window_bounds = array<i64: 1, 128>}, {pipeline_mode = #tpu.pipeline_mode<synchronous>, transform_indices = @transform_7, window_bounds = array<i64: 128, 128>}, {pipeline_mode = #tpu.pipeline_mode<synchronous>, transform_indices = @transform_8, window_bounds = array<i64: 1, 128>}, {transform_indices = @transform_9, window_bounds = array<i64: 128, 128>}]} {
    %c0 = arith.constant 0 : index
    %c0_0 = arith.constant 0 : index
    %0 = vector.load %arg1[%c0, %c0_0] : memref<128x4xf32, #tpu.memory_space<vmem>>, vector<128x4xf32>
    %c0_1 = arith.constant 0 : index
    %c0_2 = arith.constant 0 : index
    %1 = vector.load %arg2[%c0_1, %c0_2] : memref<4x128xbf16, #tpu.memory_space<vmem>>, vector<4x128xbf16>
    %c0_3 = arith.constant 0 : index
    %c0_4 = arith.constant 0 : index
    %2 = vector.load %arg3[%c0_3, %c0_4] : memref<1x128xf32, #tpu.memory_space<vmem>>, vector<1x128xf32>
    %3 = arith.truncf %0 : vector<128x4xf32> to vector<128x4xbf16>
    %cst = arith.constant dense<0.000000e+00> : vector<128x128xf32>
    %4 = tpu.matmul %3, %1, %cst {dimension_numbers = #tpu.dot_dimension_numbers<[1], [0], [0], [1], [0, 0, 1, 1], [], []>} : vector<128x4xbf16>, vector<4x128xbf16>, vector<128x128xf32> -> vector<128x128xf32>
    %5 = vector.broadcast %2 : vector<1x128xf32> to vector<128x128xf32>
    %6 = arith.addf %4, %5 : vector<128x128xf32>
    %7 = arith.negf %6 : vector<128x128xf32>
    %8 = math.exp %7 : vector<128x128xf32>
    %cst_5 = arith.constant 1.000000e+00 : f32
    %9 = vector.broadcast %cst_5 : f32 to vector<128x128xf32>
    %10 = arith.addf %9, %8 : vector<128x128xf32>
    %11 = arith.divf %9, %10 : vector<128x128xf32>
    %12 = arith.mulf %6, %11 : vector<128x128xf32>
    %13 = arith.truncf %12 : vector<128x128xf32> to vector<128x128xbf16>
    %c0_6 = arith.constant 0 : index
    %c0_7 = arith.constant 0 : index
    %14 = vector.load %arg4[%c0_6, %c0_7] : memref<128x128xbf16, #tpu.memory_space<vmem>>, vector<128x128xbf16>
    %c0_8 = arith.constant 0 : index
    %c0_9 = arith.constant 0 : index
    %15 = vector.load %arg5[%c0_8, %c0_9] : memref<1x128xf32, #tpu.memory_space<vmem>>, vector<1x128xf32>
    %cst_10 = arith.constant dense<0.000000e+00> : vector<128x128xf32>
    %16 = tpu.matmul %13, %14, %cst_10 {dimension_numbers = #tpu.dot_dimension_numbers<[1], [0], [0], [1], [0, 0, 1, 1], [], []>} : vector<128x128xbf16>, vector<128x128xbf16>, vector<128x128xf32> -> vector<128x128xf32>
    %17 = vector.broadcast %15 : vector<1x128xf32> to vector<128x128xf32>
    %18 = arith.addf %16, %17 : vector<128x128xf32>
    %19 = arith.negf %18 : vector<128x128xf32>
    %20 = math.exp %19 : vector<128x128xf32>
    %cst_11 = arith.constant 1.000000e+00 : f32
    %21 = vector.broadcast %cst_11 : f32 to vector<128x128xf32>
    %22 = arith.addf %21, %20 : vector<128x128xf32>
    %23 = arith.divf %21, %22 : vector<128x128xf32>
    %24 = arith.mulf %18, %23 : vector<128x128xf32>
    %25 = arith.truncf %24 : vector<128x128xf32> to vector<128x128xbf16>
    %c0_12 = arith.constant 0 : index
    %c0_13 = arith.constant 0 : index
    %26 = vector.load %arg6[%c0_12, %c0_13] : memref<128x128xbf16, #tpu.memory_space<vmem>>, vector<128x128xbf16>
    %c0_14 = arith.constant 0 : index
    %c0_15 = arith.constant 0 : index
    %27 = vector.load %arg7[%c0_14, %c0_15] : memref<1x128xf32, #tpu.memory_space<vmem>>, vector<1x128xf32>
    %cst_16 = arith.constant dense<0.000000e+00> : vector<128x128xf32>
    %28 = tpu.matmul %25, %26, %cst_16 {dimension_numbers = #tpu.dot_dimension_numbers<[1], [0], [0], [1], [0, 0, 1, 1], [], []>} : vector<128x128xbf16>, vector<128x128xbf16>, vector<128x128xf32> -> vector<128x128xf32>
    %29 = vector.broadcast %27 : vector<1x128xf32> to vector<128x128xf32>
    %30 = arith.addf %28, %29 : vector<128x128xf32>
    %31 = arith.negf %30 : vector<128x128xf32>
    %32 = math.exp %31 : vector<128x128xf32>
    %cst_17 = arith.constant 1.000000e+00 : f32
    %33 = vector.broadcast %cst_17 : f32 to vector<128x128xf32>
    %34 = arith.addf %33, %32 : vector<128x128xf32>
    %35 = arith.divf %33, %34 : vector<128x128xf32>
    %36 = arith.mulf %30, %35 : vector<128x128xf32>
    %37 = arith.truncf %36 : vector<128x128xf32> to vector<128x128xbf16>
    %c0_18 = arith.constant 0 : index
    %c0_19 = arith.constant 0 : index
    %38 = vector.load %arg8[%c0_18, %c0_19] : memref<128x128xbf16, #tpu.memory_space<vmem>>, vector<128x128xbf16>
    %c0_20 = arith.constant 0 : index
    %c0_21 = arith.constant 0 : index
    %39 = vector.load %arg9[%c0_20, %c0_21] : memref<1x128xf32, #tpu.memory_space<vmem>>, vector<1x128xf32>
    %cst_22 = arith.constant dense<0.000000e+00> : vector<128x128xf32>
    %40 = tpu.matmul %37, %38, %cst_22 {dimension_numbers = #tpu.dot_dimension_numbers<[1], [0], [0], [1], [0, 0, 1, 1], [], []>} : vector<128x128xbf16>, vector<128x128xbf16>, vector<128x128xf32> -> vector<128x128xf32>
    %41 = vector.broadcast %39 : vector<1x128xf32> to vector<128x128xf32>
    %42 = arith.addf %40, %41 : vector<128x128xf32>
    %43 = math.tanh %42 : vector<128x128xf32>
    %c0_23 = arith.constant 0 : index
    %c0_24 = arith.constant 0 : index
    %44 = vector.load %arg10[%c0_23, %c0_24] : memref<128x128xf32, #tpu.memory_space<vmem>>, vector<128x128xf32>
    tpu.vector_store %arg10[%c0_23, %c0_24], %43 {strides = array<i32>} : memref<128x128xf32, #tpu.memory_space<vmem>>, vector<128x128xf32>,
    return
  }
  func.func @transform_0(%arg0: i32) -> (i32, i32) {
    %c0_i32 = arith.constant 0 : i32
    %c0_i32_0 = arith.constant 0 : i32
    return %arg0, %c0_i32 : i32, i32
  }
  func.func @transform_1(%arg0: i32) -> (i32, i32) {
    %c0_i32 = arith.constant 0 : i32
    %c0_i32_0 = arith.constant 0 : i32
    %c0_i32_1 = arith.constant 0 : i32
    return %c0_i32, %c0_i32_0 : i32, i32
  }
  func.func @transform_2(%arg0: i32) -> (i32, i32) {
    %c0_i32 = arith.constant 0 : i32
    %c0_i32_0 = arith.constant 0 : i32
    %c0_i32_1 = arith.constant 0 : i32
    return %c0_i32, %c0_i32_0 : i32, i32
  }
  func.func @transform_3(%arg0: i32) -> (i32, i32) {
    %c0_i32 = arith.constant 0 : i32
    %c0_i32_0 = arith.constant 0 : i32
    %c0_i32_1 = arith.constant 0 : i32
    return %c0_i32, %c0_i32_0 : i32, i32
  }
  func.func @transform_4(%arg0: i32) -> (i32, i32) {
    %c0_i32 = arith.constant 0 : i32
    %c0_i32_0 = arith.constant 0 : i32
    %c0_i32_1 = arith.constant 0 : i32
    return %c0_i32, %c0_i32_0 : i32, i32
  }
  func.func @transform_5(%arg0: i32) -> (i32, i32) {
    %c0_i32 = arith.constant 0 : i32
    %c0_i32_0 = arith.constant 0 : i32
    %c0_i32_1 = arith.constant 0 : i32
    return %c0_i32, %c0_i32_0 : i32, i32
  }
  func.func @transform_6(%arg0: i32) -> (i32, i32) {
    %c0_i32 = arith.constant 0 : i32
    %c0_i32_0 = arith.constant 0 : i32
    %c0_i32_1 = arith.constant 0 : i32
    return %c0_i32, %c0_i32_0 : i32, i32
  }
  func.func @transform_7(%arg0: i32) -> (i32, i32) {
    %c0_i32 = arith.constant 0 : i32
    %c0_i32_0 = arith.constant 0 : i32
    %c0_i32_1 = arith.constant 0 : i32
    return %c0_i32, %c0_i32_0 : i32, i32
  }
  func.func @transform_8(%arg0: i32) -> (i32, i32) {
    %c0_i32 = arith.constant 0 : i32
    %c0_i32_0 = arith.constant 0 : i32
    %c0_i32_1 = arith.constant 0 : i32
    return %c0_i32, %c0_i32_0 : i32, i32
  }
  func.func @transform_9(%arg0: i32) -> (i32, i32) {
    %c0_i32 = arith.constant 0 : i32
    %c0_i32_0 = arith.constant 0 : i32
    return %arg0, %c0_i32 : i32, i32
  }
}

</mosaic_0001>

<llo_original>
// kernel: tpu_custom_call.1
$region0: #{tpu_custom_call.1}
  #allocation0 [shape = 'u32[]', space=smem, size = 0x4, offset = 0x4, fixed_abs, tag = 'smem constant byte address 0x4 - core index']
  #allocation1 [shape = 'u32[144,128]{1,0:T(1,128)}', space=vmem, size = 0x12000, scoped, tag = 'internal scratch']
  %s0 = inlined_call_operand.vmem [shape: f32[256,4], index: 0, kind: input, shape index: {}]
  %s1 = inlined_call_operand.vmem [shape: bf16[4,128], index: 1, kind: input, shape index: {}]
  %s2 = inlined_call_operand.vmem [shape: f32[1,128], index: 2, kind: input, shape index: {}]
  %s3 = inlined_call_operand.vmem [shape: bf16[128,128], index: 3, kind: input, shape index: {}]
  %s4 = inlined_call_operand.vmem [shape: f32[1,128], index: 4, kind: input, shape index: {}]
  %s5 = inlined_call_operand.vmem [shape: bf16[128,128], index: 5, kind: input, shape index: {}]
  %s6 = inlined_call_operand.vmem [shape: f32[1,128], index: 6, kind: input, shape index: {}]
  %s7 = inlined_call_operand.vmem [shape: bf16[128,128], index: 7, kind: input, shape index: {}]
  %s8 = inlined_call_operand.vmem [shape: f32[1,128], index: 8, kind: input, shape index: {}]
  %s9 = inlined_call_operand.hbm [shape: f32[256,128], index: 9, kind: output, shape index: {}]
  %s10 = sld [smem:[#allocation0]]
  $region69: #{tpu_custom_call.1} parent=0
    _
  %s12 = ssub.s32 1, %s10
  %s13 = scalar_select 0, %s12, %s10
  $region1: #{tpu_custom_call.1} parent=0
    #allocation2 [shape = 'u8[131072]{0}', space=vmem, size = 0x20000, scoped, tag = 'output window, operand 0']
    #allocation3 [shape = 's32[2]{0}', space=sflag, size = 0x8, scoped, tag = 'scoped memory for tpu_custom_call.1']
    %14 = vsyncpa [#allocation3], 0
    %s15 = scalar_lea.sflag [#allocation3], 1
    %16 = vsyncpa %s15, 0
    loop: start=0, step=1, limit=4
    $region2: #{tpu_custom_call.1} parent=1 // loop_pre_header
      _
    $region3: #{tpu_custom_call.1} parent=1 // loop_header
      %s18 = sphi 0, %s22
      %p19 = scmp.ge.s32.totalorder %s18, 4
      %s28 = sphi 0, %s30
      %s31 = sphi 0, %s28
      %s32 = sphi 0, %s31
      %s48 = sphi 0, %s32
      %s52 = sphi 0, %s52
      %s54 = sphi 0, %s52
      %s55 = sphi 0, %s54
      %s69 = sphi 0, %s55
      %s73 = sphi 0, %s73
      %s75 = sphi 0, %s73
      %s76 = sphi 0, %s75
      %s90 = sphi 0, %s76
      %s94 = sphi 0, %s94
      %s96 = sphi 0, %s94
      %s97 = sphi 0, %s96
      %s111 = sphi 0, %s97
      %s115 = sphi 0, %s115
      %s117 = sphi 0, %s115
      %s118 = sphi 0, %s117
      %s132 = sphi 0, %s118
      %s136 = sphi 0, %s136
      %s138 = sphi 0, %s136
      %s139 = sphi 0, %s138
      %s153 = sphi 0, %s139
      %s157 = sphi 0, %s157
      %s159 = sphi 0, %s157
      %s160 = sphi 0, %s159
      %s174 = sphi 0, %s160
      %s178 = sphi 0, %s178
      %s180 = sphi 0, %s178
      %s181 = sphi 0, %s180
      %s195 = sphi 0, %s181
      %s199 = sphi 0, %s199
      %s201 = sphi 0, %s199
      %s202 = sphi 0, %s201
      %s216 = sphi 0, %s202
      %s222 = sphi 0, %s224
      %s225 = sphi 0, %s222
      %s226 = sphi 0, %s225
      %s242 = sphi 0, %s226
    $region4: #{tpu_custom_call.1} parent=1 // loop_header_branch
      %21 = sbr.rel (%p19) target = $region8
    $region5: #{tpu_custom_call.1} parent=1 // loop_body
      %s23 = ssub.s32 %s18, 1
      %s24 = ssub.s32 %s18, 2
      %s25 = sadd.s32 %s18, 1
      %s26 = ssub.s32 %s18, %s25
      %p27 = scmp.eq.s32.totalorder %s26, 0
      %s29 = sadd.s32 %s28, 1
      %s30 = scalar_select %p27, %s28, %s29
      %p33 = pneg %p27
      %p34 = scmp.eq.s32.totalorder %s18, 1
      %p35 = por %p33, %p34
      %p36 = scmp.ne.s32.totalorder %s28, %s31
      %p37 = scmp.eq.s32.totalorder %s18, 0
      %p38 = por %p36, %p37
      %p39 = scmp.ne.s32.totalorder %s28, %s31
      %p40 = scmp.eq.s32.totalorder %s23, 1
      %p41 = por %p39, %p40
      %p42 = scmp.ne.s32.totalorder %s31, %s32
      %p43 = scmp.eq.s32.totalorder %s23, 0
      %p44 = por %p42, %p43
      %p45 = scmp.ne.s32.totalorder %s31, %s32
      %p46 = scmp.eq.s32.totalorder %s24, 1
      %p47 = por %p45, %p46
      %p49 = scmp.ne.s32.totalorder %s32, %s48
      %p50 = scmp.eq.s32.totalorder %s24, 0
      %p51 = por %p49, %p50
      %s53 = sadd.s32 %s52, 1
      %p56 = scmp.eq.s32.totalorder %s18, 1
      %p57 = scmp.ne.s32.totalorder %s52, %s54
      %p58 = scmp.eq.s32.totalorder %s18, 0
      %p59 = por %p57, %p58
      %p60 = scmp.ne.s32.totalorder %s52, %s54
      %p61 = scmp.eq.s32.totalorder %s23, 1
      %p62 = por %p60, %p61
      %p63 = scmp.ne.s32.totalorder %s54, %s55
      %p64 = scmp.eq.s32.totalorder %s23, 0
      %p65 = por %p63, %p64
      %p66 = scmp.ne.s32.totalorder %s54, %s55
      %p67 = scmp.eq.s32.totalorder %s24, 1
      %p68 = por %p66, %p67
      %p70 = scmp.ne.s32.totalorder %s55, %s69
      %p71 = scmp.eq.s32.totalorder %s24, 0
      %p72 = por %p70, %p71
      %s74 = sadd.s32 %s73, 1
      %p77 = scmp.eq.s32.totalorder %s18, 1
      %p78 = scmp.ne.s32.totalorder %s73, %s75
      %p79 = scmp.eq.s32.totalorder %s18, 0
      %p80 = por %p78, %p79
      %p81 = scmp.ne.s32.totalorder %s73, %s75
      %p82 = scmp.eq.s32.totalorder %s23, 1
      %p83 = por %p81, %p82
      %p84 = scmp.ne.s32.totalorder %s75, %s76
      %p85 = scmp.eq.s32.totalorder %s23, 0
      %p86 = por %p84, %p85
      %p87 = scmp.ne.s32.totalorder %s75, %s76
      %p88 = scmp.eq.s32.totalorder %s24, 1
      %p89 = por %p87, %p88
      %p91 = scmp.ne.s32.totalorder %s76, %s90
      %p92 = scmp.eq.s32.totalorder %s24, 0
      %p93 = por %p91, %p92
      %s95 = sadd.s32 %s94, 1
      %p98 = scmp.eq.s32.totalorder %s18, 1
      %p99 = scmp.ne.s32.totalorder %s94, %s96
      %p100 = scmp.eq.s32.totalorder %s18, 0
      %p101 = por %p99, %p100
      %p102 = scmp.ne.s32.totalorder %s94, %s96
      %p103 = scmp.eq.s32.totalorder %s23, 1
      %p104 = por %p102, %p103
      %p105 = scmp.ne.s32.totalorder %s96, %s97
      %p106 = scmp.eq.s32.totalorder %s23, 0
      %p107 = por %p105, %p106
      %p108 = scmp.ne.s32.totalorder %s96, %s97
      %p109 = scmp.eq.s32.totalorder %s24, 1
      %p110 = por %p108, %p109
      %p112 = scmp.ne.s32.totalorder %s97, %s111
      %p113 = scmp.eq.s32.totalorder %s24, 0
      %p114 = por %p112, %p113
      %s116 = sadd.s32 %s115, 1
      %p119 = scmp.eq.s32.totalorder %s18, 1
      %p120 = scmp.ne.s32.totalorder %s115, %s117
      %p121 = scmp.eq.s32.totalorder %s18, 0
      %p122 = por %p120, %p121
      %p123 = scmp.ne.s32.totalorder %s115, %s117
      %p124 = scmp.eq.s32.totalorder %s23, 1
      %p125 = por %p123, %p124
      %p126 = scmp.ne.s32.totalorder %s117, %s118
      %p127 = scmp.eq.s32.totalorder %s23, 0
      %p128 = por %p126, %p127
      %p129 = scmp.ne.s32.totalorder %s117, %s118
      %p130 = scmp.eq.s32.totalorder %s24, 1
      %p131 = por %p129, %p130
      %p133 = scmp.ne.s32.totalorder %s118, %s132
      %p134 = scmp.eq.s32.totalorder %s24, 0
      %p135 = por %p133, %p134
      %s137 = sadd.s32 %s136, 1
      %p140 = scmp.eq.s32.totalorder %s18, 1
      %p141 = scmp.ne.s32.totalorder %s136, %s138
      %p142 = scmp.eq.s32.totalorder %s18, 0
      %p143 = por %p141, %p142
      %p144 = scmp.ne.s32.totalorder %s136, %s138
      %p145 = scmp.eq.s32.totalorder %s23, 1
      %p146 = por %p144, %p145
      %p147 = scmp.ne.s32.totalorder %s138, %s139
      %p148 = scmp.eq.s32.totalorder %s23, 0
      %p149 = por %p147, %p148
      %p150 = scmp.ne.s32.totalorder %s138, %s139
      %p151 = scmp.eq.s32.totalorder %s24, 1
      %p152 = por %p150, %p151
      %p154 = scmp.ne.s32.totalorder %s139, %s153
      %p155 = scmp.eq.s32.totalorder %s24, 0
      %p156 = por %p154, %p155
      %s158 = sadd.s32 %s157, 1
      %p161 = scmp.eq.s32.totalorder %s18, 1
      %p162 = scmp.ne.s32.totalorder %s157, %s159
      %p163 = scmp.eq.s32.totalorder %s18, 0
      %p164 = por %p162, %p163
      %p165 = scmp.ne.s32.totalorder %s157, %s159
      %p166 = scmp.eq.s32.totalorder %s23, 1
      %p167 = por %p165, %p166
      %p168 = scmp.ne.s32.totalorder %s159, %s160
      %p169 = scmp.eq.s32.totalorder %s23, 0
      %p170 = por %p168, %p169
      %p171 = scmp.ne.s32.totalorder %s159, %s160
      %p172 = scmp.eq.s32.totalorder %s24, 1
      %p173 = por %p171, %p172
      %p175 = scmp.ne.s32.totalorder %s160, %s174
      %p176 = scmp.eq.s32.totalorder %s24, 0
      %p177 = por %p175, %p176
      %s179 = sadd.s32 %s178, 1
      %p182 = scmp.eq.s32.totalorder %s18, 1
      %p183 = scmp.ne.s32.totalorder %s178, %s180
      %p184 = scmp.eq.s32.totalorder %s18, 0
      %p185 = por %p183, %p184
      %p186 = scmp.ne.s32.totalorder %s178, %s180
      %p187 = scmp.eq.s32.totalorder %s23, 1
      %p188 = por %p186, %p187
      %p189 = scmp.ne.s32.totalorder %s180, %s181
      %p190 = scmp.eq.s32.totalorder %s23, 0
      %p191 = por %p189, %p190
      %p192 = scmp.ne.s32.totalorder %s180, %s181
      %p193 = scmp.eq.s32.totalorder %s24, 1
      %p194 = por %p192, %p193
      %p196 = scmp.ne.s32.totalorder %s181, %s195
      %p197 = scmp.eq.s32.totalorder %s24, 0
      %p198 = por %p196, %p197
      %s200 = sadd.s32 %s199, 1
      %p203 = scmp.eq.s32.totalorder %s18, 1
      %p204 = scmp.ne.s32.totalorder %s199, %s201
      %p205 = scmp.eq.s32.totalorder %s18, 0
      %p206 = por %p204, %p205
      %p207 = scmp.ne.s32.totalorder %s199, %s201
      %p208 = scmp.eq.s32.totalorder %s23, 1
      %p209 = por %p207, %p208
      %p210 = scmp.ne.s32.totalorder %s201, %s202
      %p211 = scmp.eq.s32.totalorder %s23, 0
      %p212 = por %p210, %p211
      %p213 = scmp.ne.s32.totalorder %s201, %s202
      %p214 = scmp.eq.s32.totalorder %s24, 1
      %p215 = por %p213, %p214
      %p217 = scmp.ne.s32.totalorder %s202, %s216
      %p218 = scmp.eq.s32.totalorder %s24, 0
      %p219 = por %p217, %p218
      %s220 = ssub.s32 %s18, %s25
      %p221 = scmp.eq.s32.totalorder %s220, 0
      %s223 = sadd.s32 %s222, 1
      %s224 = scalar_select %p221, %s222, %s223
      %p227 = pneg %p221
      %p228 = scmp.eq.s32.totalorder %s18, 1
      %p229 = por %p227, %p228
      %p230 = scmp.ne.s32.totalorder %s222, %s225
      %p231 = scmp.eq.s32.totalorder %s18, 0
      %p232 = por %p230, %p231
      %p233 = scmp.ne.s32.totalorder %s222, %s225
      %p234 = scmp.eq.s32.totalorder %s23, 1
      %p235 = por %p233, %p234
      %p236 = scmp.ne.s32.totalorder %s225, %s226
      %p237 = scmp.eq.s32.totalorder %s23, 0
      %p238 = por %p236, %p237
      %p239 = scmp.ne.s32.totalorder %s225, %s226
      %p240 = scmp.eq.s32.totalorder %s24, 1
      %p241 = por %p239, %p240
      %p243 = scmp.ne.s32.totalorder %s226, %s242
      %p244 = scmp.eq.s32.totalorder %s24, 0
      %p245 = por %p243, %p244
      %p246 = scmp.le.s32.totalorder 1, %s18
      %p247 = scmp.lt.s32.totalorder %s18, 3
      %p248 = pnand %p246, %p247
      %p249 = pneg %p248
      // Predicated region
      $region9: #{tpu_custom_call.1} parent=5 // pred_check
        _
      $region10: #{tpu_custom_call.1} parent=5 // pred_check_branch
        %251 = sbr.rel (%p248) target = $region12
      $region11: #{tpu_custom_call.1} parent=5 // pred_region
        %s252 = ssub.s32 %s18, 1
        // Predicated region
        $region13: #{tpu_custom_call.1} parent=11 // pred_check
          %p253 = pneg %p65
        $region14: #{tpu_custom_call.1} parent=11 // pred_check_branch
          %255 = sbr.rel (%p253) target = $region16
        $region15: #{tpu_custom_call.1} parent=11 // pred_region
          _
        $region16: #{tpu_custom_call.1} parent=11 // pred_fallthru
          _
        // Predicated region
        $region17: #{tpu_custom_call.1} parent=11 // pred_check
          %p256 = pneg %p86
        $region18: #{tpu_custom_call.1} parent=11 // pred_check_branch
          %258 = sbr.rel (%p256) target = $region20
        $region19: #{tpu_custom_call.1} parent=11 // pred_region
          _
        $region20: #{tpu_custom_call.1} parent=11 // pred_fallthru
          _
        // Predicated region
        $region21: #{tpu_custom_call.1} parent=11 // pred_check
          %p259 = pneg %p107
        $region22: #{tpu_custom_call.1} parent=11 // pred_check_branch
          %261 = sbr.rel (%p259) target = $region24
        $region23: #{tpu_custom_call.1} parent=11 // pred_region
          _
        $region24: #{tpu_custom_call.1} parent=11 // pred_fallthru
          _
        // Predicated region
        $region25: #{tpu_custom_call.1} parent=11 // pred_check
          %p262 = pneg %p128
        $region26: #{tpu_custom_call.1} parent=11 // pred_check_branch
          %264 = sbr.rel (%p262) target = $region28
        $region27: #{tpu_custom_call.1} parent=11 // pred_region
          _
        $region28: #{tpu_custom_call.1} parent=11 // pred_fallthru
          _
        // Predicated region
        $region29: #{tpu_custom_call.1} parent=11 // pred_check
          %p265 = pneg %p149
        $region30: #{tpu_custom_call.1} parent=11 // pred_check_branch
          %267 = sbr.rel (%p265) target = $region32
        $region31: #{tpu_custom_call.1} parent=11 // pred_region
          _
        $region32: #{tpu_custom_call.1} parent=11 // pred_fallthru
          _
        // Predicated region
        $region33: #{tpu_custom_call.1} parent=11 // pred_check
          %p268 = pneg %p170
        $region34: #{tpu_custom_call.1} parent=11 // pred_check_branch
          %270 = sbr.rel (%p268) target = $region36
        $region35: #{tpu_custom_call.1} parent=11 // pred_region
          _
        $region36: #{tpu_custom_call.1} parent=11 // pred_fallthru
          _
        // Predicated region
        $region37: #{tpu_custom_call.1} parent=11 // pred_check
          %p271 = pneg %p191
        $region38: #{tpu_custom_call.1} parent=11 // pred_check_branch
          %273 = sbr.rel (%p271) target = $region40
        $region39: #{tpu_custom_call.1} parent=11 // pred_region
          _
        $region40: #{tpu_custom_call.1} parent=11 // pred_fallthru
          _
        // Predicated region
        $region41: #{tpu_custom_call.1} parent=11 // pred_check
          %p274 = pneg %p212
        $region42: #{tpu_custom_call.1} parent=11 // pred_check_branch
          %276 = sbr.rel (%p274) target = $region44
        $region43: #{tpu_custom_call.1} parent=11 // pred_region
          _
        $region44: #{tpu_custom_call.1} parent=11 // pred_fallthru
          _
      $region12: #{tpu_custom_call.1} parent=5 // pred_fallthru
        _
      %p277 = scmp.lt.s32.totalorder %s18, 2
      // Predicated region
      $region45: #{tpu_custom_call.1} parent=5 // pred_check
        %p278 = pneg %p277
      $region46: #{tpu_custom_call.1} parent=5 // pred_check_branch
        %280 = sbr.rel (%p278) target = $region48
      $region47: #{tpu_custom_call.1} parent=5 // pred_region
        // Predicated region
        $region49: #{tpu_custom_call.1} parent=47 // pred_check
          %p281 = pneg %p38
        $region50: #{tpu_custom_call.1} parent=47 // pred_check_branch
          %283 = sbr.rel (%p281) target = $region52
        $region51: #{tpu_custom_call.1} parent=47 // pred_region
          %s284 = smul.u32 16, %s18
          %p285 = scmp.lt.s32.totalorder %s284, 31
          %s286 = scalar_select %p285, %s284, 31
          %s287 = smul.addr %s286, 8
          %s288 = scalar_lea.vmem %s0, %s287
          %s289 = smul.u32 16, %s18
        $region52: #{tpu_custom_call.1} parent=47 // pred_fallthru
          _
      $region48: #{tpu_custom_call.1} parent=5 // pred_fallthru
        _
      %p290 = scmp.le.s32.totalorder 1, %s18
      %p291 = scmp.lt.s32.totalorder %s18, 3
      %p292 = pnand %p290, %p291
      %p293 = pneg %p292
      // Predicated region
      $region53: #{tpu_custom_call.1} parent=5 // pred_check
        _
      $region54: #{tpu_custom_call.1} parent=5 // pred_check_branch
        %295 = sbr.rel (%p292) target = $region56
      $region55: #{tpu_custom_call.1} parent=5 // pred_region
        %s296 = ssub.s32 %s18, 1
        %s297 = smul.u32 16, %s23
        %p298 = scmp.lt.s32.totalorder %s297, 31
        %s299 = scalar_select %p298, %s297, 31
        %s300 = smul.addr %s299, 8
        %s301 = scalar_lea.vmem %s0, %s300
        %p302 = pneg %p44
        %p303 = pneg %p41
        %p304 = pneg %p65
        %p305 = pneg %p62
        %p306 = pneg %p86
        %p307 = pneg %p83
        %p308 = pneg %p107
        %p309 = pneg %p104
        %p310 = pneg %p128
        %p311 = pneg %p125
        %p312 = pneg %p149
        %p313 = pneg %p146
        %p314 = pneg %p170
        %p315 = pneg %p167
        %p316 = pneg %p191
        %p317 = pneg %p188
        %p318 = pneg %p212
        %p319 = pneg %p209
        %p320 = pneg %p238
        %p321 = pneg %p235
        %s322 = sand.u32 %s225, 1
        %s323 = scalar_lea.sflag [#allocation3], %s322
        %s324 = sand.u32 %s225, 1
        %s325 = smul.addr %s324, 128
        %s326 = scalar_lea.vmem [#allocation2], %s325
        %s327 = smul.u32 16, %s23
        %p328 = scmp.lt.s32.totalorder %s327, 31
        %s329 = scalar_select %p328, %s327, 31
        %s330 = smul.addr %s329, 8
        %s331 = scalar_lea.vmem %s0, %s330
        %s332 = smul.u32 16, %s23
        %s333 = smul.u32 16, %s23
        %v335 = vld [vmem:[%s331] sm:$0xff]
        %v336 = vld [vmem:[%s331 + $0x8] sm:$0xff]
        %v337 = vld [vmem:[%s331 + $0x10] sm:$0xff]
        %v338 = vld [vmem:[%s331 + $0x18] sm:$0xff]
        %v339 = vld [vmem:[%s331 + $0x20] sm:$0xff]
        %v340 = vld [vmem:[%s331 + $0x28] sm:$0xff]
        %v341 = vld [vmem:[%s331 + $0x30] sm:$0xff]
        %v342 = vld [vmem:[%s331 + $0x38] sm:$0xff]
        %v343 = vld [vmem:[%s331 + $0x40] sm:$0xff]
        %v344 = vld [vmem:[%s331 + $0x48] sm:$0xff]
        %v345 = vld [vmem:[%s331 + $0x50] sm:$0xff]
        %v346 = vld [vmem:[%s331 + $0x58] sm:$0xff]
        %v347 = vld [vmem:[%s331 + $0x60] sm:$0xff]
        %v348 = vld [vmem:[%s331 + $0x68] sm:$0xff]
        %v349 = vld [vmem:[%s331 + $0x70] sm:$0xff]
        %v350 = vld [vmem:[%s331 + $0x78] sm:$0xff]
        %v351 = vld [vmem:[%s1] sm:$0x3]
        %v352 = vld [vmem:[%s2] sm:$0x1]
        %v353 = vpack.c.bf16 %v336, %v335
        %v354 = vpack.c.bf16 %v338, %v337
        %v355 = vpack.c.bf16 %v340, %v339
        %v356 = vpack.c.bf16 %v342, %v341
        %v357 = vpack.c.bf16 %v344, %v343
        %v358 = vpack.c.bf16 %v346, %v345
        %v359 = vpack.c.bf16 %v348, %v347
        %v360 = vpack.c.bf16 %v350, %v349
        %v362 = vlaneseq
        %v363 = vshrl.u32 %v362, 7
        %v364 = vsub.s32 0, %v363
        %v365 = vrot.slane %v352, %v364
        %vm367 = vcmask 31744
        %v369 = vsel %vm367, %v353, 0
        %v372 = vsel %vm367, %v354, 0
        %v375 = vsel %vm367, %v355, 0
        %v378 = vsel %vm367, %v356, 0
        %v381 = vsel %vm367, %v357, 0
        %v384 = vsel %vm367, %v358, 0
        %v387 = vsel %vm367, %v359, 0
        %v390 = vsel %vm367, %v360, 0
        %vm392 = vcmask 1041408
        %v394 = vsel %vm392, %v351, 0
        %396 = vmatprep.subr.bf16.mxu0 0
        %397 = vmatpush1.bf16.msra.mxu0 %v394
        %398 = vmatprep.subr.bf16.mxu0 0
        %399 = vmatpush1.bf16.msra.mxu0 0
        %400 = vmatprep.subr.bf16.mxu0 0
        %401 = vmatpush1.bf16.msra.mxu0 0
        %402 = vmatprep.subr.bf16.mxu0 0
        %403 = vmatpush1.bf16.msra.mxu0 0
        %404 = vmatprep.subr.bf16.mxu0 0
        %405 = vmatpush1.bf16.msra.mxu0 0
        %406 = vmatprep.subr.bf16.mxu0 0
        %407 = vmatpush1.bf16.msra.mxu0 0
        %408 = vmatprep.subr.bf16.mxu0 0
        %409 = vmatpush1.bf16.msra.mxu0 0
        %410 = vmatprep.subr.bf16.mxu0 0
        %411 = vmatpush1.bf16.msra.mxu0 0
        %412 = vmatprep.subr.bf16.mxu0 0
        %413 = vmatpush1.bf16.msra.mxu0 0
        %414 = vmatprep.subr.bf16.mxu0 0
        %415 = vmatpush1.bf16.msra.mxu0 0
        %416 = vmatprep.subr.bf16.mxu0 0
        %417 = vmatpush1.bf16.msra.mxu0 0
        %418 = vmatprep.subr.bf16.mxu0 0
        %419 = vmatpush1.bf16.msra.mxu0 0
        %420 = vmatprep.subr.bf16.mxu0 0
        %421 = vmatpush1.bf16.msra.mxu0 0
        %422 = vmatprep.subr.bf16.mxu0 0
        %423 = vmatpush1.bf16.msra.mxu0 0
        %424 = vmatprep.subr.bf16.mxu0 0
        %425 = vmatpush1.bf16.msra.mxu0 0
        %426 = vmatprep.subr.bf16.mxu0 0
        %427 = vmatpush1.bf16.msra.mxu0 0
        %428 = vmatprep.mubr.bf16.mxu0 0
        %429 = vmatmul.mubr.bf16.gmra.mrb[0].mxu0 %v369
        %v430 = vpop.f32.mrb[0].mxu0
        %v431 = vadd.f32 %v365, %v430
        %v432 = vpop.f32.mrb[0].mxu0
        %v433 = vpop.f32.mrb[0].mxu0
        %v434 = vadd.f32 %v365, %v433
        %v435 = vpop.f32.mrb[0].mxu0
        %436 = vmatprep.mubr.bf16.mxu0 0
        %437 = vmatmul.mubr.bf16.gmra.mrb[0].mxu0 %v372
        %v438 = vpop.f32.mrb[0].mxu0
        %v439 = vadd.f32 %v365, %v438
        %v440 = vpop.f32.mrb[0].mxu0
        %v441 = vpop.f32.mrb[0].mxu0
        %v442 = vadd.f32 %v365, %v441
        %v443 = vpop.f32.mrb[0].mxu0
        %444 = vmatprep.mubr.bf16.mxu0 0
        %445 = vmatmul.mubr.bf16.gmra.mrb[0].mxu0 %v375
        %v446 = vpop.f32.mrb[0].mxu0
        %v447 = vadd.f32 %v365, %v446
        %v448 = vpop.f32.mrb[0].mxu0
        %v449 = vpop.f32.mrb[0].mxu0
        %v450 = vadd.f32 %v365, %v449
        %v451 = vpop.f32.mrb[0].mxu0
        %452 = vmatprep.mubr.bf16.mxu0 0
        %453 = vmatmul.mubr.bf16.gmra.mrb[0].mxu0 %v378
        %v454 = vpop.f32.mrb[0].mxu0
        %v455 = vadd.f32 %v365, %v454
        %v456 = vpop.f32.mrb[0].mxu0
        %v457 = vpop.f32.mrb[0].mxu0
        %v458 = vadd.f32 %v365, %v457
        %v459 = vpop.f32.mrb[0].mxu0
        %460 = vmatprep.mubr.bf16.mxu0 0
        %461 = vmatmul.mubr.bf16.gmra.mrb[0].mxu0 %v381
        %v462 = vpop.f32.mrb[0].mxu0
        %v463 = vadd.f32 %v365, %v462
        %v464 = vpop.f32.mrb[0].mxu0
        %v465 = vpop.f32.mrb[0].mxu0
        %v466 = vadd.f32 %v365, %v465
        %v467 = vpop.f32.mrb[0].mxu0
        %468 = vmatprep.mubr.bf16.mxu0 0
        %469 = vmatmul.mubr.bf16.gmra.mrb[0].mxu0 %v384
        %v470 = vpop.f32.mrb[0].mxu0
        %v471 = vadd.f32 %v365, %v470
        %v472 = vpop.f32.mrb[0].mxu0
        %v473 = vpop.f32.mrb[0].mxu0
        %v474 = vadd.f32 %v365, %v473
        %v475 = vpop.f32.mrb[0].mxu0
        %476 = vmatprep.mubr.bf16.mxu0 0
        %477 = vmatmul.mubr.bf16.gmra.mrb[0].mxu0 %v387
        %v478 = vpop.f32.mrb[0].mxu0
        %v479 = vadd.f32 %v365, %v478
        %v480 = vpop.f32.mrb[0].mxu0
        %v481 = vpop.f32.mrb[0].mxu0
        %v482 = vadd.f32 %v365, %v481
        %v483 = vpop.f32.mrb[0].mxu0
        %484 = vmatprep.mubr.bf16.mxu0 0
        %485 = vmatmul.mubr.bf16.gmra.mrb[0].mxu0 %v390
        %v486 = vpop.f32.mrb[0].mxu0
        %v487 = vadd.f32 %v365, %v486
        %v488 = vpop.f32.mrb[0].mxu0
        %v489 = vpop.f32.mrb[0].mxu0
        %v490 = vadd.f32 %v365, %v489
        %v491 = vpop.f32.mrb[0].mxu0
        %492 = vdwg.mxu0
        %v493 = vxor.u32 %v431, 2147483648
        %v494 = vxor.u32 %v434, 2147483648
        %v495 = vxor.u32 %v439, 2147483648
        %v496 = vxor.u32 %v442, 2147483648
        %v497 = vxor.u32 %v447, 2147483648
        %v498 = vxor.u32 %v450, 2147483648
        %v499 = vxor.u32 %v455, 2147483648
        %v500 = vxor.u32 %v458, 2147483648
        %v501 = vxor.u32 %v463, 2147483648
        %v502 = vxor.u32 %v466, 2147483648
        %v503 = vxor.u32 %v471, 2147483648
        %v504 = vxor.u32 %v474, 2147483648
        %v505 = vxor.u32 %v479, 2147483648
        %v506 = vxor.u32 %v482, 2147483648
        %v507 = vxor.u32 %v487, 2147483648
        %v508 = vxor.u32 %v490, 2147483648
        %v509 = vmul.f32 %v493, 1.442695
        %v510 = vpow.pop %v509
        %v511 = vmul.f32 %v494, 1.442695
        %v512 = vpow.pop %v511
        %v513 = vmul.f32 %v495, 1.442695
        %v514 = vpow.pop %v513
        %v515 = vmul.f32 %v496, 1.442695
        %v516 = vpow.pop %v515
        %v517 = vmul.f32 %v497, 1.442695
        %v518 = vpow.pop %v517
        %v519 = vmul.f32 %v498, 1.442695
        %v520 = vpow.pop %v519
        %v521 = vmul.f32 %v499, 1.442695
        %v522 = vpow.pop %v521
        %v523 = vmul.f32 %v500, 1.442695
        %v524 = vpow.pop %v523
        %v525 = vmul.f32 %v501, 1.442695
        %v526 = vpow.pop %v525
        %v527 = vmul.f32 %v502, 1.442695
        %v528 = vpow.pop %v527
        %v529 = vmul.f32 %v503, 1.442695
        %v530 = vpow.pop %v529
        %v531 = vmul.f32 %v504, 1.442695
        %v532 = vpow.pop %v531
        %v533 = vmul.f32 %v505, 1.442695
        %v534 = vpow.pop %v533
        %v535 = vmul.f32 %v506, 1.442695
        %v536 = vpow.pop %v535
        %v537 = vmul.f32 %v507, 1.442695
        %v538 = vpow.pop %v537
        %v539 = vmul.f32 %v508, 1.442695
        %v540 = vpow.pop %v539
        %v541 = vadd.f32 %v510, 1.0
        %v542 = vadd.f32 %v512, 1.0
        %v543 = vadd.f32 %v514, 1.0
        %v544 = vadd.f32 %v516, 1.0
        %v545 = vadd.f32 %v518, 1.0
        %v546 = vadd.f32 %v520, 1.0
        %v547 = vadd.f32 %v522, 1.0
        %v548 = vadd.f32 %v524, 1.0
        %v549 = vadd.f32 %v526, 1.0
        %v550 = vadd.f32 %v528, 1.0
        %v551 = vadd.f32 %v530, 1.0
        %v552 = vadd.f32 %v532, 1.0
        %v553 = vadd.f32 %v534, 1.0
        %v554 = vadd.f32 %v536, 1.0
        %v555 = vadd.f32 %v538, 1.0
        %v556 = vadd.f32 %v540, 1.0
        %v557 = vrcp.pop %v541
        %v558 = vmul.f32 1.0, %v557
        %v559 = vrcp.pop %v542
        %v560 = vmul.f32 1.0, %v559
        %v561 = vrcp.pop %v543
        %v562 = vmul.f32 1.0, %v561
        %v563 = vrcp.pop %v544
        %v564 = vmul.f32 1.0, %v563
        %v565 = vrcp.pop %v545
        %v566 = vmul.f32 1.0, %v565
        %v567 = vrcp.pop %v546
        %v568 = vmul.f32 1.0, %v567
        %v569 = vrcp.pop %v547
        %v570 = vmul.f32 1.0, %v569
        %v571 = vrcp.pop %v548
        %v572 = vmul.f32 1.0, %v571
        %v573 = vrcp.pop %v549
        %v574 = vmul.f32 1.0, %v573
        %v575 = vrcp.pop %v550
        %v576 = vmul.f32 1.0, %v575
        %v577 = vrcp.pop %v551
        %v578 = vmul.f32 1.0, %v577
        %v579 = vrcp.pop %v552
        %v580 = vmul.f32 1.0, %v579
        %v581 = vrcp.pop %v553
        %v582 = vmul.f32 1.0, %v581
        %v583 = vrcp.pop %v554
        %v584 = vmul.f32 1.0, %v583
        %v585 = vrcp.pop %v555
        %v586 = vmul.f32 1.0, %v585
        %v587 = vrcp.pop %v556
        %v588 = vmul.f32 1.0, %v587
        %v589 = vmul.f32 %v431, %v558
        %v590 = vmul.f32 %v434, %v560
        %v591 = vmul.f32 %v439, %v562
        %v592 = vmul.f32 %v442, %v564
        %v593 = vmul.f32 %v447, %v566
        %v594 = vmul.f32 %v450, %v568
        %v595 = vmul.f32 %v455, %v570
        %v596 = vmul.f32 %v458, %v572
        %v597 = vmul.f32 %v463, %v574
        %v598 = vmul.f32 %v466, %v576
        %v599 = vmul.f32 %v471, %v578
        %v600 = vmul.f32 %v474, %v580
        %v601 = vmul.f32 %v479, %v582
        %v602 = vmul.f32 %v482, %v584
        %v603 = vmul.f32 %v487, %v586
        %v604 = vmul.f32 %v490, %v588
        %v605 = vpack.c.bf16 %v590, %v589
        %v606 = vpack.c.bf16 %v592, %v591
        %v607 = vpack.c.bf16 %v594, %v593
        %v608 = vpack.c.bf16 %v596, %v595
        %v609 = vpack.c.bf16 %v598, %v597
        %v610 = vpack.c.bf16 %v600, %v599
        %v611 = vpack.c.bf16 %v602, %v601
        %v612 = vpack.c.bf16 %v604, %v603
        %v613 = vld [vmem:[%s3] sm:$0xf]
        %v614 = vld [vmem:[%s3 + $0x4] sm:$0xf]
        %v615 = vld [vmem:[%s3 + $0x8] sm:$0xf]
        %v616 = vld [vmem:[%s3 + $0xc] sm:$0xf]
        %v617 = vld [vmem:[%s3 + $0x10] sm:$0xf]
        %v618 = vld [vmem:[%s3 + $0x14] sm:$0xf]
        %v619 = vld [vmem:[%s3 + $0x18] sm:$0xf]
        %v620 = vld [vmem:[%s3 + $0x1c] sm:$0xf]
        %v621 = vld [vmem:[%s3 + $0x20] sm:$0xf]
        %v622 = vld [vmem:[%s3 + $0x24] sm:$0xf]
        %v623 = vld [vmem:[%s3 + $0x28] sm:$0xf]
        %v624 = vld [vmem:[%s3 + $0x2c] sm:$0xf]
        %v625 = vld [vmem:[%s3 + $0x30] sm:$0xf]
        %v626 = vld [vmem:[%s3 + $0x34] sm:$0xf]
        %v627 = vld [vmem:[%s3 + $0x38] sm:$0xf]
        %v628 = vld [vmem:[%s3 + $0x3c] sm:$0xf]
        %v629 = vld [vmem:[%s4] sm:$0x1]
        %v631 = vlaneseq
        %v632 = vshrl.u32 %v631, 7
        %v633 = vsub.s32 0, %v632
        %v634 = vrot.slane %v629, %v633
        %v652 = vunpack.c.l.b16 %v613
        %v653 = vunpack.c.l.b16 %v614
        %v654 = vunpack.c.l.b16 %v615
        %v655 = vunpack.c.l.b16 %v616
        %v656 = vunpack.c.l.b16 %v617
        %v657 = vunpack.c.l.b16 %v618
        %v658 = vunpack.c.l.b16 %v619
        %v659 = vunpack.c.l.b16 %v620
        %v660 = vunpack.c.l.b16 %v621
        %v661 = vunpack.c.l.b16 %v622
        %v662 = vunpack.c.l.b16 %v623
        %v663 = vunpack.c.l.b16 %v624
        %v664 = vunpack.c.l.b16 %v625
        %v665 = vunpack.c.l.b16 %v626
        %v666 = vunpack.c.l.b16 %v627
        %v667 = vunpack.c.l.b16 %v628
        %v668 = vpack.c.b16 %v653, %v652
        %v669 = vpack.c.b16 %v655, %v654
        %v670 = vpack.c.b16 %v657, %v656
        %v671 = vpack.c.b16 %v659, %v658
        %v672 = vpack.c.b16 %v661, %v660
        %v673 = vpack.c.b16 %v663, %v662
        %v674 = vpack.c.b16 %v665, %v664
        %v675 = vpack.c.b16 %v667, %v666
        %684 = vmatprep.subr.bf16.mxu0 0
        %685 = vmatpush1.bf16.msra.mxu0 %v668
        %686 = vmatprep.subr.bf16.mxu0 0
        %687 = vmatpush1.bf16.msra.mxu0 %v669
        %688 = vmatprep.subr.bf16.mxu0 0
        %689 = vmatpush1.bf16.msra.mxu0 %v670
        %690 = vmatprep.subr.bf16.mxu0 0
        %691 = vmatpush1.bf16.msra.mxu0 %v671
        %692 = vmatprep.subr.bf16.mxu0 0
        %693 = vmatpush1.bf16.msra.mxu0 %v672
        %694 = vmatprep.subr.bf16.mxu0 0
        %695 = vmatpush1.bf16.msra.mxu0 %v673
        %696 = vmatprep.subr.bf16.mxu0 0
        %697 = vmatpush1.bf16.msra.mxu0 %v674
        %698 = vmatprep.subr.bf16.mxu0 0
        %699 = vmatpush1.bf16.msra.mxu0 %v675
        %700 = vmatprep.subr.bf16.mxu0 0
        %701 = vmatpush1.bf16.msra.mxu0 0
        %702 = vmatprep.subr.bf16.mxu0 0
        %703 = vmatpush1.bf16.msra.mxu0 0
        %704 = vmatprep.subr.bf16.mxu0 0
        %705 = vmatpush1.bf16.msra.mxu0 0
        %706 = vmatprep.subr.bf16.mxu0 0
        %707 = vmatpush1.bf16.msra.mxu0 0
        %708 = vmatprep.subr.bf16.mxu0 0
        %709 = vmatpush1.bf16.msra.mxu0 0
        %710 = vmatprep.subr.bf16.mxu0 0
        %711 = vmatpush1.bf16.msra.mxu0 0
        %712 = vmatprep.subr.bf16.mxu0 0
        %713 = vmatpush1.bf16.msra.mxu0 0
        %714 = vmatprep.subr.bf16.mxu0 0
        %715 = vmatpush1.bf16.msra.mxu0 0
        %716 = vmatprep.mubr.bf16.mxu0 0
        %717 = vmatmul.mubr.bf16.gmra.mrb[0].mxu0 %v605
        %v718 = vpop.f32.mrb[0].mxu0
        %v719 = vadd.f32 %v634, %v718
        %v720 = vpop.f32.mrb[0].mxu0
        %v721 = vpop.f32.mrb[0].mxu0
        %v722 = vadd.f32 %v634, %v721
        %v723 = vpop.f32.mrb[0].mxu0
        %724 = vmatprep.mubr.bf16.mxu0 0
        %725 = vmatmul.mubr.bf16.gmra.mrb[0].mxu0 %v606
        %v726 = vpop.f32.mrb[0].mxu0
        %v727 = vadd.f32 %v634, %v726
        %v728 = vpop.f32.mrb[0].mxu0
        %v729 = vpop.f32.mrb[0].mxu0
        %v730 = vadd.f32 %v634, %v729
        %v731 = vpop.f32.mrb[0].mxu0
        %732 = vmatprep.mubr.bf16.mxu0 0
        %733 = vmatmul.mubr.bf16.gmra.mrb[0].mxu0 %v607
        %v734 = vpop.f32.mrb[0].mxu0
        %v735 = vadd.f32 %v634, %v734
        %v736 = vpop.f32.mrb[0].mxu0
        %v737 = vpop.f32.mrb[0].mxu0
        %v738 = vadd.f32 %v634, %v737
        %v739 = vpop.f32.mrb[0].mxu0
        %740 = vmatprep.mubr.bf16.mxu0 0
        %741 = vmatmul.mubr.bf16.gmra.mrb[0].mxu0 %v608
        %v742 = vpop.f32.mrb[0].mxu0
        %v743 = vadd.f32 %v634, %v742
        %v744 = vpop.f32.mrb[0].mxu0
        %v745 = vpop.f32.mrb[0].mxu0
        %v746 = vadd.f32 %v634, %v745
        %v747 = vpop.f32.mrb[0].mxu0
        %748 = vmatprep.mubr.bf16.mxu0 0
        %749 = vmatmul.mubr.bf16.gmra.mrb[0].mxu0 %v609
        %v750 = vpop.f32.mrb[0].mxu0
        %v751 = vadd.f32 %v634, %v750
        %v752 = vpop.f32.mrb[0].mxu0
        %v753 = vpop.f32.mrb[0].mxu0
        %v754 = vadd.f32 %v634, %v753
        %v755 = vpop.f32.mrb[0].mxu0
        %756 = vmatprep.mubr.bf16.mxu0 0
        %757 = vmatmul.mubr.bf16.gmra.mrb[0].mxu0 %v610
        %v758 = vpop.f32.mrb[0].mxu0
        %v759 = vadd.f32 %v634, %v758
        %v760 = vpop.f32.mrb[0].mxu0
        %v761 = vpop.f32.mrb[0].mxu0
        %v762 = vadd.f32 %v634, %v761
        %v763 = vpop.f32.mrb[0].mxu0
        %764 = vmatprep.mubr.bf16.mxu0 0
        %765 = vmatmul.mubr.bf16.gmra.mrb[0].mxu0 %v611
        %v766 = vpop.f32.mrb[0].mxu0
        %v767 = vadd.f32 %v634, %v766
        %v768 = vpop.f32.mrb[0].mxu0
        %v769 = vpop.f32.mrb[0].mxu0
        %v770 = vadd.f32 %v634, %v769
        %v771 = vpop.f32.mrb[0].mxu0
        %772 = vmatprep.mubr.bf16.mxu0 0
        %773 = vmatmul.mubr.bf16.gmra.mrb[0].mxu0 %v612
        %v774 = vpop.f32.mrb[0].mxu0
        %v775 = vadd.f32 %v634, %v774
        %v776 = vpop.f32.mrb[0].mxu0
        %v777 = vpop.f32.mrb[0].mxu0
        %v778 = vadd.f32 %v634, %v777
        %v779 = vpop.f32.mrb[0].mxu0
        %780 = vdwg.mxu0
        %v781 = vxor.u32 %v719, 2147483648
        %v782 = vxor.u32 %v722, 2147483648
        %v783 = vxor.u32 %v727, 2147483648
        %v784 = vxor.u32 %v730, 2147483648
        %v785 = vxor.u32 %v735, 2147483648
        %v786 = vxor.u32 %v738, 2147483648
        %v787 = vxor.u32 %v743, 2147483648
        %v788 = vxor.u32 %v746, 2147483648
        %v789 = vxor.u32 %v751, 2147483648
        %v790 = vxor.u32 %v754, 2147483648
        %v791 = vxor.u32 %v759, 2147483648
        %v792 = vxor.u32 %v762, 2147483648
        %v793 = vxor.u32 %v767, 2147483648
        %v794 = vxor.u32 %v770, 2147483648
        %v795 = vxor.u32 %v775, 2147483648
        %v796 = vxor.u32 %v778, 2147483648
        %v797 = vmul.f32 %v781, 1.442695
        %v798 = vpow.pop %v797
        %v799 = vmul.f32 %v782, 1.442695
        %v800 = vpow.pop %v799
        %v801 = vmul.f32 %v783, 1.442695
        %v802 = vpow.pop %v801
        %v803 = vmul.f32 %v784, 1.442695
        %v804 = vpow.pop %v803
        %v805 = vmul.f32 %v785, 1.442695
        %v806 = vpow.pop %v805
        %v807 = vmul.f32 %v786, 1.442695
        %v808 = vpow.pop %v807
        %v809 = vmul.f32 %v787, 1.442695
        %v810 = vpow.pop %v809
        %v811 = vmul.f32 %v788, 1.442695
        %v812 = vpow.pop %v811
        %v813 = vmul.f32 %v789, 1.442695
        %v814 = vpow.pop %v813
        %v815 = vmul.f32 %v790, 1.442695
        %v816 = vpow.pop %v815
        %v817 = vmul.f32 %v791, 1.442695
        %v818 = vpow.pop %v817
        %v819 = vmul.f32 %v792, 1.442695
        %v820 = vpow.pop %v819
        %v821 = vmul.f32 %v793, 1.442695
        %v822 = vpow.pop %v821
        %v823 = vmul.f32 %v794, 1.442695
        %v824 = vpow.pop %v823
        %v825 = vmul.f32 %v795, 1.442695
        %v826 = vpow.pop %v825
        %v827 = vmul.f32 %v796, 1.442695
        %v828 = vpow.pop %v827
        %v829 = vadd.f32 %v798, 1.0
        %v830 = vadd.f32 %v800, 1.0
        %v831 = vadd.f32 %v802, 1.0
        %v832 = vadd.f32 %v804, 1.0
        %v833 = vadd.f32 %v806, 1.0
        %v834 = vadd.f32 %v808, 1.0
        %v835 = vadd.f32 %v810, 1.0
        %v836 = vadd.f32 %v812, 1.0
        %v837 = vadd.f32 %v814, 1.0
        %v838 = vadd.f32 %v816, 1.0
        %v839 = vadd.f32 %v818, 1.0
        %v840 = vadd.f32 %v820, 1.0
        %v841 = vadd.f32 %v822, 1.0
        %v842 = vadd.f32 %v824, 1.0
        %v843 = vadd.f32 %v826, 1.0
        %v844 = vadd.f32 %v828, 1.0
        %v845 = vrcp.pop %v829
        %v846 = vmul.f32 1.0, %v845
        %v847 = vrcp.pop %v830
        %v848 = vmul.f32 1.0, %v847
        %v849 = vrcp.pop %v831
        %v850 = vmul.f32 1.0, %v849
        %v851 = vrcp.pop %v832
        %v852 = vmul.f32 1.0, %v851
        %v853 = vrcp.pop %v833
        %v854 = vmul.f32 1.0, %v853
        %v855 = vrcp.pop %v834
        %v856 = vmul.f32 1.0, %v855
        %v857 = vrcp.pop %v835
        %v858 = vmul.f32 1.0, %v857
        %v859 = vrcp.pop %v836
        %v860 = vmul.f32 1.0, %v859
        %v861 = vrcp.pop %v837
        %v862 = vmul.f32 1.0, %v861
        %v863 = vrcp.pop %v838
        %v864 = vmul.f32 1.0, %v863
        %v865 = vrcp.pop %v839
        %v866 = vmul.f32 1.0, %v865
        %v867 = vrcp.pop %v840
        %v868 = vmul.f32 1.0, %v867
        %v869 = vrcp.pop %v841
        %v870 = vmul.f32 1.0, %v869
        %v871 = vrcp.pop %v842
        %v872 = vmul.f32 1.0, %v871
        %v873 = vrcp.pop %v843
        %v874 = vmul.f32 1.0, %v873
        %v875 = vrcp.pop %v844
        %v876 = vmul.f32 1.0, %v875
        %v877 = vmul.f32 %v719, %v846
        %v878 = vmul.f32 %v722, %v848
        %v879 = vmul.f32 %v727, %v850
        %v880 = vmul.f32 %v730, %v852
        %v881 = vmul.f32 %v735, %v854
        %v882 = vmul.f32 %v738, %v856
        %v883 = vmul.f32 %v743, %v858
        %v884 = vmul.f32 %v746, %v860
        %v885 = vmul.f32 %v751, %v862
        %v886 = vmul.f32 %v754, %v864
        %v887 = vmul.f32 %v759, %v866
        %v888 = vmul.f32 %v762, %v868
        %v889 = vmul.f32 %v767, %v870
        %v890 = vmul.f32 %v770, %v872
        %v891 = vmul.f32 %v775, %v874
        %v892 = vmul.f32 %v778, %v876
        %v893 = vpack.c.bf16 %v878, %v877
        %v894 = vpack.c.bf16 %v880, %v879
        %v895 = vpack.c.bf16 %v882, %v881
        %v896 = vpack.c.bf16 %v884, %v883
        %v897 = vpack.c.bf16 %v886, %v885
        %v898 = vpack.c.bf16 %v888, %v887
        %v899 = vpack.c.bf16 %v890, %v889
        %v900 = vpack.c.bf16 %v892, %v891
        %v901 = vld [vmem:[%s5] sm:$0xf]
        %v902 = vld [vmem:[%s5 + $0x4] sm:$0xf]
        %v903 = vld [vmem:[%s5 + $0x8] sm:$0xf]
        %v904 = vld [vmem:[%s5 + $0xc] sm:$0xf]
        %v905 = vld [vmem:[%s5 + $0x10] sm:$0xf]
        %v906 = vld [vmem:[%s5 + $0x14] sm:$0xf]
        %v907 = vld [vmem:[%s5 + $0x18] sm:$0xf]
        %v908 = vld [vmem:[%s5 + $0x1c] sm:$0xf]
        %v909 = vld [vmem:[%s5 + $0x20] sm:$0xf]
        %v910 = vld [vmem:[%s5 + $0x24] sm:$0xf]
        %v911 = vld [vmem:[%s5 + $0x28] sm:$0xf]
        %v912 = vld [vmem:[%s5 + $0x2c] sm:$0xf]
        %v913 = vld [vmem:[%s5 + $0x30] sm:$0xf]
        %v914 = vld [vmem:[%s5 + $0x34] sm:$0xf]
        %v915 = vld [vmem:[%s5 + $0x38] sm:$0xf]
        %v916 = vld [vmem:[%s5 + $0x3c] sm:$0xf]
        %v917 = vld [vmem:[%s6] sm:$0x1]
        %v919 = vlaneseq
        %v920 = vshrl.u32 %v919, 7
        %v921 = vsub.s32 0, %v920
        %v922 = vrot.slane %v917, %v921
        %v940 = vunpack.c.l.b16 %v901
        %v941 = vunpack.c.l.b16 %v902
        %v942 = vunpack.c.l.b16 %v903
        %v943 = vunpack.c.l.b16 %v904
        %v944 = vunpack.c.l.b16 %v905
        %v945 = vunpack.c.l.b16 %v906
        %v946 = vunpack.c.l.b16 %v907
        %v947 = vunpack.c.l.b16 %v908
        %v948 = vunpack.c.l.b16 %v909
        %v949 = vunpack.c.l.b16 %v910
        %v950 = vunpack.c.l.b16 %v911
        %v951 = vunpack.c.l.b16 %v912
        %v952 = vunpack.c.l.b16 %v913
        %v953 = vunpack.c.l.b16 %v914
        %v954 = vunpack.c.l.b16 %v915
        %v955 = vunpack.c.l.b16 %v916
        %v956 = vpack.c.b16 %v941, %v940
        %v957 = vpack.c.b16 %v943, %v942
        %v958 = vpack.c.b16 %v945, %v944
        %v959 = vpack.c.b16 %v947, %v946
        %v960 = vpack.c.b16 %v949, %v948
        %v961 = vpack.c.b16 %v951, %v950
        %v962 = vpack.c.b16 %v953, %v952
        %v963 = vpack.c.b16 %v955, %v954
        %972 = vmatprep.subr.bf16.mxu0 0
        %973 = vmatpush1.bf16.msra.mxu0 %v956
        %974 = vmatprep.subr.bf16.mxu0 0
        %975 = vmatpush1.bf16.msra.mxu0 %v957
        %976 = vmatprep.subr.bf16.mxu0 0
        %977 = vmatpush1.bf16.msra.mxu0 %v958
        %978 = vmatprep.subr.bf16.mxu0 0
        %979 = vmatpush1.bf16.msra.mxu0 %v959
        %980 = vmatprep.subr.bf16.mxu0 0
        %981 = vmatpush1.bf16.msra.mxu0 %v960
        %982 = vmatprep.subr.bf16.mxu0 0
        %983 = vmatpush1.bf16.msra.mxu0 %v961
        %984 = vmatprep.subr.bf16.mxu0 0
        %985 = vmatpush1.bf16.msra.mxu0 %v962
        %986 = vmatprep.subr.bf16.mxu0 0
        %987 = vmatpush1.bf16.msra.mxu0 %v963
        %988 = vmatprep.subr.bf16.mxu0 0
        %989 = vmatpush1.bf16.msra.mxu0 0
        %990 = vmatprep.subr.bf16.mxu0 0
        %991 = vmatpush1.bf16.msra.mxu0 0
        %992 = vmatprep.subr.bf16.mxu0 0
        %993 = vmatpush1.bf16.msra.mxu0 0
        %994 = vmatprep.subr.bf16.mxu0 0
        %995 = vmatpush1.bf16.msra.mxu0 0
        %996 = vmatprep.subr.bf16.mxu0 0
        %997 = vmatpush1.bf16.msra.mxu0 0
        %998 = vmatprep.subr.bf16.mxu0 0
        %999 = vmatpush1.bf16.msra.mxu0 0
        %1000 = vmatprep.subr.bf16.mxu0 0
        %1001 = vmatpush1.bf16.msra.mxu0 0
        %1002 = vmatprep.subr.bf16.mxu0 0
        %1003 = vmatpush1.bf16.msra.mxu0 0
        %1004 = vmatprep.mubr.bf16.mxu0 0
        %1005 = vmatmul.mubr.bf16.gmra.mrb[0].mxu0 %v893
        %v1006 = vpop.f32.mrb[0].mxu0
        %v1007 = vadd.f32 %v922, %v1006
        %v1008 = vpop.f32.mrb[0].mxu0
        %v1009 = vpop.f32.mrb[0].mxu0
        %v1010 = vadd.f32 %v922, %v1009
        %v1011 = vpop.f32.mrb[0].mxu0
        %1012 = vmatprep.mubr.bf16.mxu0 0
        %1013 = vmatmul.mubr.bf16.gmra.mrb[0].mxu0 %v894
        %v1014 = vpop.f32.mrb[0].mxu0
        %v1015 = vadd.f32 %v922, %v1014
        %v1016 = vpop.f32.mrb[0].mxu0
        %v1017 = vpop.f32.mrb[0].mxu0
        %v1018 = vadd.f32 %v922, %v1017
        %v1019 = vpop.f32.mrb[0].mxu0
        %1020 = vmatprep.mubr.bf16.mxu0 0
        %1021 = vmatmul.mubr.bf16.gmra.mrb[0].mxu0 %v895
        %v1022 = vpop.f32.mrb[0].mxu0
        %v1023 = vadd.f32 %v922, %v1022
        %v1024 = vpop.f32.mrb[0].mxu0
        %v1025 = vpop.f32.mrb[0].mxu0
        %v1026 = vadd.f32 %v922, %v1025
        %v1027 = vpop.f32.mrb[0].mxu0
        %1028 = vmatprep.mubr.bf16.mxu0 0
        %1029 = vmatmul.mubr.bf16.gmra.mrb[0].mxu0 %v896
        %v1030 = vpop.f32.mrb[0].mxu0
        %v1031 = vadd.f32 %v922, %v1030
        %v1032 = vpop.f32.mrb[0].mxu0
        %v1033 = vpop.f32.mrb[0].mxu0
        %v1034 = vadd.f32 %v922, %v1033
        %v1035 = vpop.f32.mrb[0].mxu0
        %1036 = vmatprep.mubr.bf16.mxu0 0
        %1037 = vmatmul.mubr.bf16.gmra.mrb[0].mxu0 %v897
        %v1038 = vpop.f32.mrb[0].mxu0
        %v1039 = vadd.f32 %v922, %v1038
        %v1040 = vpop.f32.mrb[0].mxu0
        %v1041 = vpop.f32.mrb[0].mxu0
        %v1042 = vadd.f32 %v922, %v1041
        %v1043 = vpop.f32.mrb[0].mxu0
        %1044 = vmatprep.mubr.bf16.mxu0 0
        %1045 = vmatmul.mubr.bf16.gmra.mrb[0].mxu0 %v898
        %v1046 = vpop.f32.mrb[0].mxu0
        %v1047 = vadd.f32 %v922, %v1046
        %v1048 = vpop.f32.mrb[0].mxu0
        %v1049 = vpop.f32.mrb[0].mxu0
        %v1050 = vadd.f32 %v922, %v1049
        %v1051 = vpop.f32.mrb[0].mxu0
        %1052 = vmatprep.mubr.bf16.mxu0 0
        %1053 = vmatmul.mubr.bf16.gmra.mrb[0].mxu0 %v899
        %v1054 = vpop.f32.mrb[0].mxu0
        %v1055 = vadd.f32 %v922, %v1054
        %v1056 = vpop.f32.mrb[0].mxu0
        %v1057 = vpop.f32.mrb[0].mxu0
        %v1058 = vadd.f32 %v922, %v1057
        %v1059 = vpop.f32.mrb[0].mxu0
        %1060 = vmatprep.mubr.bf16.mxu0 0
        %1061 = vmatmul.mubr.bf16.gmra.mrb[0].mxu0 %v900
        %v1062 = vpop.f32.mrb[0].mxu0
        %v1063 = vadd.f32 %v922, %v1062
        %v1064 = vpop.f32.mrb[0].mxu0
        %v1065 = vpop.f32.mrb[0].mxu0
        %v1066 = vadd.f32 %v922, %v1065
        %v1067 = vpop.f32.mrb[0].mxu0
        %1068 = vdwg.mxu0
        %v1069 = vxor.u32 %v1007, 2147483648
        %v1070 = vxor.u32 %v1010, 2147483648
        %v1071 = vxor.u32 %v1015, 2147483648
        %v1072 = vxor.u32 %v1018, 2147483648
        %v1073 = vxor.u32 %v1023, 2147483648
        %v1074 = vxor.u32 %v1026, 2147483648
        %v1075 = vxor.u32 %v1031, 2147483648
        %v1076 = vxor.u32 %v1034, 2147483648
        %v1077 = vxor.u32 %v1039, 2147483648
        %v1078 = vxor.u32 %v1042, 2147483648
        %v1079 = vxor.u32 %v1047, 2147483648
        %v1080 = vxor.u32 %v1050, 2147483648
        %v1081 = vxor.u32 %v1055, 2147483648
        %v1082 = vxor.u32 %v1058, 2147483648
        %v1083 = vxor.u32 %v1063, 2147483648
        %v1084 = vxor.u32 %v1066, 2147483648
        %v1085 = vmul.f32 %v1069, 1.442695
        %v1086 = vpow.pop %v1085
        %v1087 = vmul.f32 %v1070, 1.442695
        %v1088 = vpow.pop %v1087
        %v1089 = vmul.f32 %v1071, 1.442695
        %v1090 = vpow.pop %v1089
        %v1091 = vmul.f32 %v1072, 1.442695
        %v1092 = vpow.pop %v1091
        %v1093 = vmul.f32 %v1073, 1.442695
        %v1094 = vpow.pop %v1093
        %v1095 = vmul.f32 %v1074, 1.442695
        %v1096 = vpow.pop %v1095
        %v1097 = vmul.f32 %v1075, 1.442695
        %v1098 = vpow.pop %v1097
        %v1099 = vmul.f32 %v1076, 1.442695
        %v1100 = vpow.pop %v1099
        %v1101 = vmul.f32 %v1077, 1.442695
        %v1102 = vpow.pop %v1101
        %v1103 = vmul.f32 %v1078, 1.442695
        %v1104 = vpow.pop %v1103
        %v1105 = vmul.f32 %v1079, 1.442695
        %v1106 = vpow.pop %v1105
        %v1107 = vmul.f32 %v1080, 1.442695
        %v1108 = vpow.pop %v1107
        %v1109 = vmul.f32 %v1081, 1.442695
        %v1110 = vpow.pop %v1109
        %v1111 = vmul.f32 %v1082, 1.442695
        %v1112 = vpow.pop %v1111
        %v1113 = vmul.f32 %v1083, 1.442695
        %v1114 = vpow.pop %v1113
        %v1115 = vmul.f32 %v1084, 1.442695
        %v1116 = vpow.pop %v1115
        %v1117 = vadd.f32 %v1086, 1.0
        %v1118 = vadd.f32 %v1088, 1.0
        %v1119 = vadd.f32 %v1090, 1.0
        %v1120 = vadd.f32 %v1092, 1.0
        %v1121 = vadd.f32 %v1094, 1.0
        %v1122 = vadd.f32 %v1096, 1.0
        %v1123 = vadd.f32 %v1098, 1.0
        %v1124 = vadd.f32 %v1100, 1.0
        %v1125 = vadd.f32 %v1102, 1.0
        %v1126 = vadd.f32 %v1104, 1.0
        %v1127 = vadd.f32 %v1106, 1.0
        %v1128 = vadd.f32 %v1108, 1.0
        %v1129 = vadd.f32 %v1110, 1.0
        %v1130 = vadd.f32 %v1112, 1.0
        %v1131 = vadd.f32 %v1114, 1.0
        %v1132 = vadd.f32 %v1116, 1.0
        %v1133 = vrcp.pop %v1117
        %v1134 = vmul.f32 1.0, %v1133
        %v1135 = vrcp.pop %v1118
        %v1136 = vmul.f32 1.0, %v1135
        %v1137 = vrcp.pop %v1119
        %v1138 = vmul.f32 1.0, %v1137
        %v1139 = vrcp.pop %v1120
        %v1140 = vmul.f32 1.0, %v1139
        %v1141 = vrcp.pop %v1121
        %v1142 = vmul.f32 1.0, %v1141
        %v1143 = vrcp.pop %v1122
        %v1144 = vmul.f32 1.0, %v1143
        %v1145 = vrcp.pop %v1123
        %v1146 = vmul.f32 1.0, %v1145
        %v1147 = vrcp.pop %v1124
        %v1148 = vmul.f32 1.0, %v1147
        %v1149 = vrcp.pop %v1125
        %v1150 = vmul.f32 1.0, %v1149
        %v1151 = vrcp.pop %v1126
        %v1152 = vmul.f32 1.0, %v1151
        %v1153 = vrcp.pop %v1127
        %v1154 = vmul.f32 1.0, %v1153
        %v1155 = vrcp.pop %v1128
        %v1156 = vmul.f32 1.0, %v1155
        %v1157 = vrcp.pop %v1129
        %v1158 = vmul.f32 1.0, %v1157
        %v1159 = vrcp.pop %v1130
        %v1160 = vmul.f32 1.0, %v1159
        %v1161 = vrcp.pop %v1131
        %v1162 = vmul.f32 1.0, %v1161
        %v1163 = vrcp.pop %v1132
        %v1164 = vmul.f32 1.0, %v1163
        %v1165 = vmul.f32 %v1007, %v1134
        %v1166 = vmul.f32 %v1010, %v1136
        %v1167 = vmul.f32 %v1015, %v1138
        %v1168 = vmul.f32 %v1018, %v1140
        %v1169 = vmul.f32 %v1023, %v1142
        %v1170 = vmul.f32 %v1026, %v1144
        %v1171 = vmul.f32 %v1031, %v1146
        %v1172 = vmul.f32 %v1034, %v1148
        %v1173 = vmul.f32 %v1039, %v1150
        %v1174 = vmul.f32 %v1042, %v1152
        %v1175 = vmul.f32 %v1047, %v1154
        %v1176 = vmul.f32 %v1050, %v1156
        %v1177 = vmul.f32 %v1055, %v1158
        %v1178 = vmul.f32 %v1058, %v1160
        %v1179 = vmul.f32 %v1063, %v1162
        %v1180 = vmul.f32 %v1066, %v1164
        %v1181 = vpack.c.bf16 %v1166, %v1165
        %v1182 = vpack.c.bf16 %v1168, %v1167
        %v1183 = vpack.c.bf16 %v1170, %v1169
        %v1184 = vpack.c.bf16 %v1172, %v1171
        %v1185 = vpack.c.bf16 %v1174, %v1173
        %v1186 = vpack.c.bf16 %v1176, %v1175
        %v1187 = vpack.c.bf16 %v1178, %v1177
        %v1188 = vpack.c.bf16 %v1180, %v1179
        %v1189 = vld [vmem:[%s7] sm:$0xf]
        %v1190 = vld [vmem:[%s7 + $0x4] sm:$0xf]
        %v1191 = vld [vmem:[%s7 + $0x8] sm:$0xf]
        %v1192 = vld [vmem:[%s7 + $0xc] sm:$0xf]
        %v1193 = vld [vmem:[%s7 + $0x10] sm:$0xf]
        %v1194 = vld [vmem:[%s7 + $0x14] sm:$0xf]
        %v1195 = vld [vmem:[%s7 + $0x18] sm:$0xf]
        %v1196 = vld [vmem:[%s7 + $0x1c] sm:$0xf]
        %v1197 = vld [vmem:[%s7 + $0x20] sm:$0xf]
        %v1198 = vld [vmem:[%s7 + $0x24] sm:$0xf]
        %v1199 = vld [vmem:[%s7 + $0x28] sm:$0xf]
        %v1200 = vld [vmem:[%s7 + $0x2c] sm:$0xf]
        %v1201 = vld [vmem:[%s7 + $0x30] sm:$0xf]
        %v1202 = vld [vmem:[%s7 + $0x34] sm:$0xf]
        %v1203 = vld [vmem:[%s7 + $0x38] sm:$0xf]
        %v1204 = vld [vmem:[%s7 + $0x3c] sm:$0xf]
        %v1205 = vld [vmem:[%s8] sm:$0x1]
        %v1207 = vlaneseq
        %v1208 = vshrl.u32 %v1207, 7
        %v1209 = vsub.s32 0, %v1208
        %v1210 = vrot.slane %v1205, %v1209
        %v1228 = vunpack.c.l.b16 %v1189
        %v1229 = vunpack.c.l.b16 %v1190
        %v1230 = vunpack.c.l.b16 %v1191
        %v1231 = vunpack.c.l.b16 %v1192
        %v1232 = vunpack.c.l.b16 %v1193
        %v1233 = vunpack.c.l.b16 %v1194
        %v1234 = vunpack.c.l.b16 %v1195
        %v1235 = vunpack.c.l.b16 %v1196
        %v1236 = vunpack.c.l.b16 %v1197
        %v1237 = vunpack.c.l.b16 %v1198
        %v1238 = vunpack.c.l.b16 %v1199
        %v1239 = vunpack.c.l.b16 %v1200
        %v1240 = vunpack.c.l.b16 %v1201
        %v1241 = vunpack.c.l.b16 %v1202
        %v1242 = vunpack.c.l.b16 %v1203
        %v1243 = vunpack.c.l.b16 %v1204
        %v1244 = vpack.c.b16 %v1229, %v1228
        %v1245 = vpack.c.b16 %v1231, %v1230
        %v1246 = vpack.c.b16 %v1233, %v1232
        %v1247 = vpack.c.b16 %v1235, %v1234
        %v1248 = vpack.c.b16 %v1237, %v1236
        %v1249 = vpack.c.b16 %v1239, %v1238
        %v1250 = vpack.c.b16 %v1241, %v1240
        %v1251 = vpack.c.b16 %v1243, %v1242
        %1260 = vmatprep.subr.bf16.mxu0 0
        %1261 = vmatpush1.bf16.msra.mxu0 %v1244
        %1262 = vmatprep.subr.bf16.mxu0 0
        %1263 = vmatpush1.bf16.msra.mxu0 %v1245
        %1264 = vmatprep.subr.bf16.mxu0 0
        %1265 = vmatpush1.bf16.msra.mxu0 %v1246
        %1266 = vmatprep.subr.bf16.mxu0 0
        %1267 = vmatpush1.bf16.msra.mxu0 %v1247
        %1268 = vmatprep.subr.bf16.mxu0 0
        %1269 = vmatpush1.bf16.msra.mxu0 %v1248
        %1270 = vmatprep.subr.bf16.mxu0 0
        %1271 = vmatpush1.bf16.msra.mxu0 %v1249
        %1272 = vmatprep.subr.bf16.mxu0 0
        %1273 = vmatpush1.bf16.msra.mxu0 %v1250
        %1274 = vmatprep.subr.bf16.mxu0 0
        %1275 = vmatpush1.bf16.msra.mxu0 %v1251
        %1276 = vmatprep.subr.bf16.mxu0 0
        %1277 = vmatpush1.bf16.msra.mxu0 0
        %1278 = vmatprep.subr.bf16.mxu0 0
        %1279 = vmatpush1.bf16.msra.mxu0 0
        %1280 = vmatprep.subr.bf16.mxu0 0
        %1281 = vmatpush1.bf16.msra.mxu0 0
        %1282 = vmatprep.subr.bf16.mxu0 0
        %1283 = vmatpush1.bf16.msra.mxu0 0
        %1284 = vmatprep.subr.bf16.mxu0 0
        %1285 = vmatpush1.bf16.msra.mxu0 0
        %1286 = vmatprep.subr.bf16.mxu0 0
        %1287 = vmatpush1.bf16.msra.mxu0 0
        %1288 = vmatprep.subr.bf16.mxu0 0
        %1289 = vmatpush1.bf16.msra.mxu0 0
        %1290 = vmatprep.subr.bf16.mxu0 0
        %1291 = vmatpush1.bf16.msra.mxu0 0
        %1292 = vmatprep.mubr.bf16.mxu0 0
        %1293 = vmatmul.mubr.bf16.gmra.mrb[0].mxu0 %v1181
        %v1294 = vpop.f32.mrb[0].mxu0
        %v1295 = vadd.f32 %v1210, %v1294
        %v1296 = vpop.f32.mrb[0].mxu0
        %v1297 = vpop.f32.mrb[0].mxu0
        %v1298 = vadd.f32 %v1210, %v1297
        %v1299 = vpop.f32.mrb[0].mxu0
        %1300 = vmatprep.mubr.bf16.mxu0 0
        %1301 = vmatmul.mubr.bf16.gmra.mrb[0].mxu0 %v1182
        %v1302 = vpop.f32.mrb[0].mxu0
        %v1303 = vadd.f32 %v1210, %v1302
        %v1304 = vpop.f32.mrb[0].mxu0
        %v1305 = vpop.f32.mrb[0].mxu0
        %v1306 = vadd.f32 %v1210, %v1305
        %v1307 = vpop.f32.mrb[0].mxu0
        %1308 = vmatprep.mubr.bf16.mxu0 0
        %1309 = vmatmul.mubr.bf16.gmra.mrb[0].mxu0 %v1183
        %v1310 = vpop.f32.mrb[0].mxu0
        %v1311 = vadd.f32 %v1210, %v1310
        %v1312 = vpop.f32.mrb[0].mxu0
        %v1313 = vpop.f32.mrb[0].mxu0
        %v1314 = vadd.f32 %v1210, %v1313
        %v1315 = vpop.f32.mrb[0].mxu0
        %1316 = vmatprep.mubr.bf16.mxu0 0
        %1317 = vmatmul.mubr.bf16.gmra.mrb[0].mxu0 %v1184
        %v1318 = vpop.f32.mrb[0].mxu0
        %v1319 = vadd.f32 %v1210, %v1318
        %v1320 = vpop.f32.mrb[0].mxu0
        %v1321 = vpop.f32.mrb[0].mxu0
        %v1322 = vadd.f32 %v1210, %v1321
        %v1323 = vpop.f32.mrb[0].mxu0
        %1324 = vmatprep.mubr.bf16.mxu0 0
        %1325 = vmatmul.mubr.bf16.gmra.mrb[0].mxu0 %v1185
        %v1326 = vpop.f32.mrb[0].mxu0
        %v1327 = vadd.f32 %v1210, %v1326
        %v1328 = vpop.f32.mrb[0].mxu0
        %v1329 = vpop.f32.mrb[0].mxu0
        %v1330 = vadd.f32 %v1210, %v1329
        %v1331 = vpop.f32.mrb[0].mxu0
        %1332 = vmatprep.mubr.bf16.mxu0 0
        %1333 = vmatmul.mubr.bf16.gmra.mrb[0].mxu0 %v1186
        %v1334 = vpop.f32.mrb[0].mxu0
        %v1335 = vadd.f32 %v1210, %v1334
        %v1336 = vpop.f32.mrb[0].mxu0
        %v1337 = vpop.f32.mrb[0].mxu0
        %v1338 = vadd.f32 %v1210, %v1337
        %v1339 = vpop.f32.mrb[0].mxu0
        %1340 = vmatprep.mubr.bf16.mxu0 0
        %1341 = vmatmul.mubr.bf16.gmra.mrb[0].mxu0 %v1187
        %v1342 = vpop.f32.mrb[0].mxu0
        %v1343 = vadd.f32 %v1210, %v1342
        %v1344 = vpop.f32.mrb[0].mxu0
        %v1345 = vpop.f32.mrb[0].mxu0
        %v1346 = vadd.f32 %v1210, %v1345
        %v1347 = vpop.f32.mrb[0].mxu0
        %1348 = vmatprep.mubr.bf16.mxu0 0
        %1349 = vmatmul.mubr.bf16.gmra.mrb[0].mxu0 %v1188
        %v1350 = vpop.f32.mrb[0].mxu0
        %v1351 = vadd.f32 %v1210, %v1350
        %v1352 = vpop.f32.mrb[0].mxu0
        %v1353 = vpop.f32.mrb[0].mxu0
        %v1354 = vadd.f32 %v1210, %v1353
        %v1355 = vpop.f32.mrb[0].mxu0
        %1356 = vdwg.mxu0
        %v1357 = vtanh.pop %v1295
        %v1358 = vtanh.pop %v1298
        %v1359 = vtanh.pop %v1303
        %v1360 = vtanh.pop %v1306
        %v1361 = vtanh.pop %v1311
        %v1362 = vtanh.pop %v1314
        %v1363 = vtanh.pop %v1319
        %v1364 = vtanh.pop %v1322
        %v1365 = vtanh.pop %v1327
        %v1366 = vtanh.pop %v1330
        %v1367 = vtanh.pop %v1335
        %v1368 = vtanh.pop %v1338
        %v1369 = vtanh.pop %v1343
        %v1370 = vtanh.pop %v1346
        %v1371 = vtanh.pop %v1351
        %v1372 = vtanh.pop %v1354
        %1373 = vst [vmem:[%s326] sm:$0xff] %v1357
        %1374 = vst [vmem:[%s326 + $0x8] sm:$0xff] %v1358
        %1375 = vst [vmem:[%s326 + $0x10] sm:$0xff] %v1359
        %1376 = vst [vmem:[%s326 + $0x18] sm:$0xff] %v1360
        %1377 = vst [vmem:[%s326 + $0x20] sm:$0xff] %v1361
        %1378 = vst [vmem:[%s326 + $0x28] sm:$0xff] %v1362
        %1379 = vst [vmem:[%s326 + $0x30] sm:$0xff] %v1363
        %1380 = vst [vmem:[%s326 + $0x38] sm:$0xff] %v1364
        %1381 = vst [vmem:[%s326 + $0x40] sm:$0xff] %v1365
        %1382 = vst [vmem:[%s326 + $0x48] sm:$0xff] %v1366
        %1383 = vst [vmem:[%s326 + $0x50] sm:$0xff] %v1367
        %1384 = vst [vmem:[%s326 + $0x58] sm:$0xff] %v1368
        %1385 = vst [vmem:[%s326 + $0x60] sm:$0xff] %v1369
        %1386 = vst [vmem:[%s326 + $0x68] sm:$0xff] %v1370
        %1387 = vst [vmem:[%s326 + $0x70] sm:$0xff] %v1371
        %1388 = vst [vmem:[%s326 + $0x78] sm:$0xff] %v1372
        %s1389 = sand.u32 %s225, 1
        %s1390 = scalar_lea.sflag [#allocation3], %s1389
        %s1391 = sand.u32 %s225, 1
        %s1392 = smul.addr %s1391, 128
        %s1393 = scalar_lea.vmem [#allocation2], %s1392
        // Predicated region
        $region57: #{tpu_custom_call.1} parent=55 // pred_check
          %p1394 = pneg %p235
        $region58: #{tpu_custom_call.1} parent=55 // pred_check_branch
          %1396 = sbr.rel (%p1394) target = $region60
        $region59: #{tpu_custom_call.1} parent=55 // pred_region
          %s1397 = smul.u32 16, %s23
          %s1399 = ssub.s32 2048, 2048
          %1400 = vsyncadd %s1390, %s1399
          %s1401 = smul.addr %s1397, 128
          %s1402 = scalar_lea.hbm %s9, %s1401
          %s1403 = sshll.u32 %s1393, 4
          %s1404 = int_to_ptr.vmem [resolvable:$true] %s1403
          %1409 = dma.vmem_to_hbm [thread:$0]  %s1404, 2048, %s1402, %s1390, 128, 128, 8
        $region60: #{tpu_custom_call.1} parent=55 // pred_fallthru
          _
      $region56: #{tpu_custom_call.1} parent=5 // pred_fallthru
        _
      %p1410 = scmp.le.s32.totalorder 2, %s18
      // Predicated region
      $region61: #{tpu_custom_call.1} parent=5 // pred_check
        %p1411 = pneg %p1410
      $region62: #{tpu_custom_call.1} parent=5 // pred_check_branch
        %1413 = sbr.rel (%p1411) target = $region64
      $region63: #{tpu_custom_call.1} parent=5 // pred_region
        %s1414 = ssub.s32 %s18, 2
        // Predicated region
        $region65: #{tpu_custom_call.1} parent=63 // pred_check
          %p1415 = pneg %p241
        $region66: #{tpu_custom_call.1} parent=63 // pred_check_branch
          %1417 = sbr.rel (%p1415) target = $region68
        $region67: #{tpu_custom_call.1} parent=63 // pred_region
          %s1418 = sand.u32 %s226, 1
          %s1419 = scalar_lea.sflag [#allocation3], %s1418
          %s1420 = sand.u32 %s226, 1
          %s1421 = smul.addr %s1420, 128
          %s1422 = scalar_lea.vmem [#allocation2], %s1421
          %1423 = dma.done %s1419, 2048
        $region68: #{tpu_custom_call.1} parent=63 // pred_fallthru
          _
      $region64: #{tpu_custom_call.1} parent=5 // pred_fallthru
        _
    $region6: #{tpu_custom_call.1} parent=1 // loop_footer
      %s22 = sadd.s32 1, %s18
    $region7: #{tpu_custom_call.1} parent=1 // loop_footer_branch
      %17 = sbr.rel target = $region3
    $region8: #{tpu_custom_call.1} parent=1 // loop_exit
      _
    %1424 = vsyncpa [#allocation3], 1
    %s1425 = scalar_lea.sflag [#allocation3], 1
    %1426 = vsyncpa %s1425, 1

</llo_original>
